<compile_context>
chip_gen: v7x
topology: tpu7x:2x2x1
jax: 0.10.0
libtpu: 0.0.40
codegen_flags: <defaults>
</compile_context>

<pallas_src>
import functools
import math

import jax
import jax.numpy as jnp
from jax import lax
from jax.experimental import pallas as pl
from jax.experimental.pallas import tpu as pltpu


def mha_kernel(q_ref, kp_ref, vp_ref, bias_ref,
               wq_ref, bq_ref, wm_ref, bm_ref,
               o_ref,
               x_scr,
               *, num_heads, head_dim, use_bf16_exp):
    # Q projection for this tile: one full-width matmul covering all heads
    # (head-major rows); softmax scale already folded into wq/bq on host.
    qp = jnp.dot(wq_ref[...], q_ref[...],
                 preferred_element_type=jnp.float32) + bq_ref[...]
    qp = qp.astype(jnp.bfloat16)                       # (d_model, TQ)

    bias = bias_ref[...]                               # (1, N_pad) 0 / -1e30

    for h in range(num_heads):                         # small H, unrolled
        lo = h * head_dim
        qp_h = qp[lo:lo + head_dim, :]                 # (dim, TQ)    bf16
        kp_h = kp_ref[lo:lo + head_dim, :]             # (dim, N_pad) bf16
        vp_h = vp_ref[lo:lo + head_dim, :]             # (dim, N_pad) bf16

        # scores[n, m] = sum_d qp_h[d, n] * kp_h[d, m]   (no transpose)
        scores = lax.dot_general(
            qp_h, kp_h, (((0,), (0,)), ((), ())),
            preferred_element_type=jnp.float32) + bias   # (TQ, N_pad) f32

        # softmax: max/denom in f32; exp in bf16 on v6e/v7x, f32 on v5e.
        m = jnp.max(scores, axis=-1, keepdims=True)
        z = scores - m
        if use_bf16_exp:
            e = jnp.exp(z.astype(jnp.bfloat16))
            denom = jnp.sum(e.astype(jnp.float32), axis=-1, keepdims=True)
        else:
            e = jnp.exp(z)
            denom = jnp.sum(e, axis=-1, keepdims=True)
        inv = pl.reciprocal(denom, approx=True)
        prob = (e * inv).astype(jnp.bfloat16)            # (TQ, N_pad)

        # x[d, n] = sum_m prob[n, m] * vp_h[d, m]         (no transpose)
        xh = lax.dot_general(
            vp_h, prob, (((1,), (1,)), ((), ())),
            preferred_element_type=jnp.float32)           # (dim, TQ) f32

        # Store straight into the head-major slab: bounds live ranges,
        # removes the concat copy before the merge matmul.
        x_scr[lo:lo + head_dim, :] = xh

    x = x_scr[...].astype(jnp.bfloat16)                   # (d_model, TQ)
    o_ref[...] = jnp.dot(wm_ref[...], x,
                         preferred_element_type=jnp.float32) + bm_ref[...]


def multi_headed_attention(q, k, v, params, num_heads):
    B, d_model, N = q.shape
    H = num_heads
    dim = d_model // H
    assert dim * H == d_model

    # Chip-dependent knobs (safe defaults if detection fails).
    try:
        kind = jax.devices()[0].device_kind.lower()
    except Exception:
        kind = ""
    is_v7 = ("v7" in kind) or ("7x" in kind)
    use_bf16_exp = ("v6" in kind) or is_v7            # f32 exp on v5e/older

    # --- pad sequence length to a lane-dense multiple of 128 ---
    n_pad = ((N + 127) // 128) * 128
    if n_pad % 512 == 0 and not is_v7:                # bigger tiles on 128MiB-VMEM chips
        tq = 512
    elif n_pad % 256 == 0:
        tq = 256
    else:
        tq = 128
    n_tiles = n_pad // tq

    scale = 1.0 / math.sqrt(float(dim))

    # --- rearrange params to head-major channel layout ---
    # proj output channel c = d*H + h  (.view(B, dim, H, N))  -> row h*dim + d
    def proj_w(w):
        return (w.reshape(dim, H, d_model).transpose(1, 0, 2)
                .reshape(d_model, d_model))

    def proj_b(b):
        return b.reshape(dim, H).T.reshape(d_model, 1)

    # Q projection weights: softmax scale folded in, bf16 MXU operands.
    wq = (proj_w(params["wq"]) * scale).astype(jnp.bfloat16)
    bq = (proj_b(params["bq"]) * scale).astype(jnp.float32)
    # merge input channel c = d*H + h (.view(B, dim*H, N)) -> column h*dim + d
    wm = (params["wm"].reshape(d_model, dim, H).transpose(0, 2, 1)
          .reshape(d_model, d_model)).astype(jnp.bfloat16)
    bm = params["bm"].reshape(d_model, 1).astype(jnp.float32)

    # K/V projections hoisted out of the kernel: one XLA pass, head-major
    # layout, bf16.  Kernel then reads only projected K/V (no raw K/V
    # residency, no per-batch projection bubble, fully parallel grid).
    wk, bk = proj_w(params["wk"]), proj_b(params["bk"])
    wv, bv = proj_w(params["wv"]), proj_b(params["bv"])
    kp = (jnp.einsum("oc,bcn->bon", wk, k) + bk[None]).astype(jnp.bfloat16)
    vp = (jnp.einsum("oc,bcn->bon", wv, v) + bv[None]).astype(jnp.bfloat16)

    if n_pad != N:
        padn = ((0, 0), (0, 0), (0, n_pad - N))
        qb = jnp.pad(q, padn).astype(jnp.bfloat16)
        kp = jnp.pad(kp, padn)
        vp = jnp.pad(vp, padn)
    else:
        qb = q.astype(jnp.bfloat16)

    # Additive key mask (0 valid / -1e30 padded): replaces the per-head
    # (TQ, N_pad) i32 iota + select with a (1, N_pad) broadcast add.
    key_bias = jnp.where(jnp.arange(n_pad) < N, 0.0, -1e30
                         ).astype(jnp.float32).reshape(1, n_pad)

    q_spec = pl.BlockSpec((None, d_model, tq), lambda b, t: (b, 0, t))
    kv_spec = pl.BlockSpec((None, d_model, n_pad), lambda b, t: (b, 0, 0))
    bias_spec = pl.BlockSpec((1, n_pad), lambda b, t: (0, 0))
    w_spec = pl.BlockSpec((d_model, d_model), lambda b, t: (0, 0))
    b_spec = pl.BlockSpec((d_model, 1), lambda b, t: (0, 0))

    kernel = functools.partial(mha_kernel, num_heads=H, head_dim=dim,
                               use_bf16_exp=use_bf16_exp)

    out = pl.pallas_call(
        kernel,
        out_shape=jax.ShapeDtypeStruct((B, d_model, n_pad), jnp.float32),
        grid_spec=pltpu.PrefetchScalarGridSpec(
            num_scalar_prefetch=0,
            grid=(B, n_tiles),
            in_specs=[q_spec, kv_spec, kv_spec, bias_spec,
                      w_spec, b_spec, w_spec, b_spec],
            out_specs=pl.BlockSpec((None, d_model, tq), lambda b, t: (b, 0, t)),
            scratch_shapes=[pltpu.VMEM((d_model, tq), jnp.float32)]),
        compiler_params=pltpu.CompilerParams(
            # No cross-tile carried state anymore -> both axes parallel
            # (megacore sharding works even when B == 1).
            dimension_semantics=("parallel", "parallel"),
            vmem_limit_bytes=32 * 1024 * 1024),
    )(qb, kp, vp, key_bias, wq, bq, wm, bm)

    return out[:, :, :N] if n_pad != N else out


def reference(q, k, v, params, num_heads):
    """Pure-JAX mirror of the PyTorch forward (for verification)."""
    B, d_model, N = q.shape
    dim = d_model // num_heads

    def conv1x1(x, w, b):  # NCL pointwise conv
        return jnp.einsum("oc,bcn->bon", w, x) + b[None, :, None]

    qp = conv1x1(q, params["wq"], params["bq"]).reshape(B, dim, num_heads, N)
    kp = conv1x1(k, params["wk"], params["bk"]).reshape(B, dim, num_heads, N)
    vp = conv1x1(v, params["wv"], params["bv"]).reshape(B, dim, num_heads, N)
    scores = jnp.einsum("bdhn,bdhm->bhnm", qp, kp) / (dim ** 0.5)
    prob = jax.nn.softmax(scores, axis=-1)
    x = jnp.einsum("bhnm,bdhm->bdhn", prob, vp)
    xf = x.reshape(B, dim * num_heads, N)
    return conv1x1(xf, params["wm"], params["bm"])


if __name__ == "__main__":
    B, d_model, N, H = 2, 32, 16, 4

    key = jax.random.PRNGKey(0)
    ks = jax.random.split(key, 11)
    q = jax.random.normal(ks[0], (B, d_model, N), jnp.float32)
    k = jax.random.normal(ks[1], (B, d_model, N), jnp.float32)
    v = jax.random.normal(ks[2], (B, d_model, N), jnp.float32)

    # Deterministic synthetic parameters (Conv1d kernel_size=1 -> matrices).
    params = {
        "wq": 0.1 * jax.random.normal(ks[3], (d_model, d_model), jnp.float32),
        "bq": 0.1 * jax.random.normal(ks[4], (d_model,), jnp.float32),
        "wk": 0.1 * jax.random.normal(ks[5], (d_model, d_model), jnp.float32),
        "bk": 0.1 * jax.random.normal(ks[6], (d_model,), jnp.float32),
        "wv": 0.1 * jax.random.normal(ks[7], (d_model, d_model), jnp.float32),
        "bv": 0.1 * jax.random.normal(ks[8], (d_model,), jnp.float32),
        "wm": 0.1 * jax.random.normal(ks[9], (d_model, d_model), jnp.float32),
        "bm": 0.1 * jax.random.normal(ks[10], (d_model,), jnp.float32),
    }

    out = multi_headed_attention(q, k, v, params, H)
    out = jax.block_until_ready(out)

    ref = reference(q, k, v, params, H)
    max_diff = float(jnp.max(jnp.abs(out - ref)))
    # bf16 MXU operands + (possibly) bf16 exp + approx reciprocal -> loosened
    # tolerance vs pure f32.
    assert jnp.allclose(out, ref, atol=5e-2, rtol=5e-2), max_diff

    print("KERNEL_OK")
</pallas_src>

<mosaic_0001>
module attributes {stable_mosaic.version = 11 : i64} {
  func.func @mha_kernel(%arg0: i32, %arg1: i32, %arg2: memref<1x32x128xbf16, #tpu.memory_space<vmem>>, %arg3: memref<1x32x128xbf16, #tpu.memory_space<vmem>>, %arg4: memref<1x32x128xbf16, #tpu.memory_space<vmem>>, %arg5: memref<1x128xf32, #tpu.memory_space<vmem>>, %arg6: memref<32x32xbf16, #tpu.memory_space<vmem>>, %arg7: memref<32x1xf32, #tpu.memory_space<vmem>>, %arg8: memref<32x32xbf16, #tpu.memory_space<vmem>>, %arg9: memref<32x1xf32, #tpu.memory_space<vmem>>, %arg10: memref<1x32x128xf32, #tpu.memory_space<vmem>>, %arg11: memref<32x128xf32, #tpu.memory_space<vmem>>) attributes {dimension_semantics = [#tpu.dimension_semantics<parallel>, #tpu.dimension_semantics<parallel>], iteration_bounds = array<i64: 2, 1>, scalar_prefetch = 0 : i64, scratch_operands = 1 : i64, tpu.core_type = #tpu.core_type<tc>, window_params = [{transform_indices = @transform_0, window_bounds = array<i64: 1, 32, 128>}, {transform_indices = @transform_1, window_bounds = array<i64: 1, 32, 128>}, {transform_indices = @transform_2, window_bounds = array<i64: 1, 32, 128>}, {pipeline_mode = #tpu.pipeline_mode<synchronous>, transform_indices = @transform_3, window_bounds = array<i64: 1, 128>}, {pipeline_mode = #tpu.pipeline_mode<synchronous>, transform_indices = @transform_4, window_bounds = array<i64: 32, 32>}, {pipeline_mode = #tpu.pipeline_mode<synchronous>, transform_indices = @transform_5, window_bounds = array<i64: 32, 1>}, {pipeline_mode = #tpu.pipeline_mode<synchronous>, transform_indices = @transform_6, window_bounds = array<i64: 32, 32>}, {pipeline_mode = #tpu.pipeline_mode<synchronous>, transform_indices = @transform_7, window_bounds = array<i64: 32, 1>}, {transform_indices = @transform_8, window_bounds = array<i64: 1, 32, 128>}]} {
    %c0 = arith.constant 0 : index
    %c0_0 = arith.constant 0 : index
    %0 = vector.load %arg6[%c0, %c0_0] : memref<32x32xbf16, #tpu.memory_space<vmem>>, vector<32x32xbf16>
    %c0_1 = arith.constant 0 : index
    %c0_2 = arith.constant 0 : index
    %c0_3 = arith.constant 0 : index
    %1 = vector.load %arg2[%c0_1, %c0_2, %c0_3] : memref<1x32x128xbf16, #tpu.memory_space<vmem>>, vector<1x32x128xbf16>
    %2 = vector.shape_cast %1 : vector<1x32x128xbf16> to vector<32x128xbf16>
    %cst = arith.constant dense<0.000000e+00> : vector<32x128xf32>
    %3 = tpu.matmul %0, %2, %cst {dimension_numbers = #tpu.dot_dimension_numbers<[1], [0], [0], [1], [0, 0, 1, 1], [], []>} : vector<32x32xbf16>, vector<32x128xbf16>, vector<32x128xf32> -> vector<32x128xf32>
    %c0_4 = arith.constant 0 : index
    %c0_5 = arith.constant 0 : index
    %4 = vector.load %arg7[%c0_4, %c0_5] : memref<32x1xf32, #tpu.memory_space<vmem>>, vector<32x1xf32>
    %5 = vector.broadcast %4 : vector<32x1xf32> to vector<32x128xf32>
    %6 = arith.addf %3, %5 : vector<32x128xf32>
    %7 = arith.truncf %6 : vector<32x128xf32> to vector<32x128xbf16>
    %c0_6 = arith.constant 0 : index
    %c0_7 = arith.constant 0 : index
    %8 = vector.load %arg5[%c0_6, %c0_7] : memref<1x128xf32, #tpu.memory_space<vmem>>, vector<1x128xf32>
    %9 = vector.extract_strided_slice %7 {offsets = [0, 0], sizes = [8, 128], strides = [1, 1]} : vector<32x128xbf16> to vector<8x128xbf16>
    %c0_8 = arith.constant 0 : index
    %c0_9 = arith.constant 0 : index
    %c0_10 = arith.constant 0 : index
    %10 = vector.load %arg3[%c0_8, %c0_9, %c0_10] : memref<1x32x128xbf16, #tpu.memory_space<vmem>>, vector<1x8x128xbf16>
    %11 = vector.shape_cast %10 : vector<1x8x128xbf16> to vector<8x128xbf16>
    %c0_11 = arith.constant 0 : index
    %c0_12 = arith.constant 0 : index
    %c0_13 = arith.constant 0 : index
    %12 = vector.load %arg4[%c0_11, %c0_12, %c0_13] : memref<1x32x128xbf16, #tpu.memory_space<vmem>>, vector<1x8x128xbf16>
    %13 = vector.shape_cast %12 : vector<1x8x128xbf16> to vector<8x128xbf16>
    %cst_14 = arith.constant dense<0.000000e+00> : vector<128x128xf32>
    %14 = tpu.matmul %9, %11, %cst_14 {dimension_numbers = #tpu.dot_dimension_numbers<[0], [0], [1], [1], [0, 1, 1, 1], [], []>} : vector<8x128xbf16>, vector<8x128xbf16>, vector<128x128xf32> -> vector<128x128xf32>
    %15 = vector.broadcast %8 : vector<1x128xf32> to vector<128x128xf32>
    %16 = arith.addf %14, %15 : vector<128x128xf32>
    %cst_15 = arith.constant dense<0xFF800000> : vector<128xf32>
    %17 = vector.multi_reduction <maximumf>, %16, %cst_15 [1] : vector<128x128xf32> to vector<128xf32>
    %18 = vector.shape_cast %17 : vector<128xf32> to vector<128x1xf32>
    %19 = vector.broadcast %18 : vector<128x1xf32> to vector<128x128xf32>
    %20 = arith.subf %16, %19 : vector<128x128xf32>
    %21 = math.exp %20 : vector<128x128xf32>
    %cst_16 = arith.constant dense<0.000000e+00> : vector<128xf32>
    %22 = vector.multi_reduction <add>, %21, %cst_16 [1] : vector<128x128xf32> to vector<128xf32>
    %23 = vector.shape_cast %22 : vector<128xf32> to vector<128x1xf32>
    %24 = tpu.reciprocal %23 {approx = true} : vector<128x1xf32> -> vector<128x1xf32>
    %25 = vector.broadcast %24 : vector<128x1xf32> to vector<128x128xf32>
    %26 = arith.mulf %21, %25 : vector<128x128xf32>
    %27 = arith.truncf %26 : vector<128x128xf32> to vector<128x128xbf16>
    %cst_17 = arith.constant dense<0.000000e+00> : vector<8x128xf32>
    %28 = tpu.matmul %13, %27, %cst_17 {dimension_numbers = #tpu.dot_dimension_numbers<[1], [1], [0], [0], [0, 0, 1, 0], [], []>} : vector<8x128xbf16>, vector<128x128xbf16>, vector<8x128xf32> -> vector<8x128xf32>
    %c0_18 = arith.constant 0 : index
    %c0_19 = arith.constant 0 : index
    %29 = vector.load %arg11[%c0_18, %c0_19] : memref<32x128xf32, #tpu.memory_space<vmem>>, vector<8x128xf32>
    tpu.vector_store %arg11[%c0_18, %c0_19], %28 {strides = array<i32>} : memref<32x128xf32, #tpu.memory_space<vmem>>, vector<8x128xf32>,
    %30 = vector.extract_strided_slice %7 {offsets = [8, 0], sizes = [8, 128], strides = [1, 1]} : vector<32x128xbf16> to vector<8x128xbf16>
    %c0_20 = arith.constant 0 : index
    %c8 = arith.constant 8 : index
    %c0_21 = arith.constant 0 : index
    %31 = vector.load %arg3[%c0_20, %c8, %c0_21] : memref<1x32x128xbf16, #tpu.memory_space<vmem>>, vector<1x8x128xbf16>
    %32 = vector.shape_cast %31 : vector<1x8x128xbf16> to vector<8x128xbf16>
    %c0_22 = arith.constant 0 : index
    %c8_23 = arith.constant 8 : index
    %c0_24 = arith.constant 0 : index
    %33 = vector.load %arg4[%c0_22, %c8_23, %c0_24] : memref<1x32x128xbf16, #tpu.memory_space<vmem>>, vector<1x8x128xbf16>
    %34 = vector.shape_cast %33 : vector<1x8x128xbf16> to vector<8x128xbf16>
    %cst_25 = arith.constant dense<0.000000e+00> : vector<128x128xf32>
    %35 = tpu.matmul %30, %32, %cst_25 {dimension_numbers = #tpu.dot_dimension_numbers<[0], [0], [1], [1], [0, 1, 1, 1], [], []>} : vector<8x128xbf16>, vector<8x128xbf16>, vector<128x128xf32> -> vector<128x128xf32>
    %36 = vector.broadcast %8 : vector<1x128xf32> to vector<128x128xf32>
    %37 = arith.addf %35, %36 : vector<128x128xf32>
    %cst_26 = arith.constant dense<0xFF800000> : vector<128xf32>
    %38 = vector.multi_reduction <maximumf>, %37, %cst_26 [1] : vector<128x128xf32> to vector<128xf32>
    %39 = vector.shape_cast %38 : vector<128xf32> to vector<128x1xf32>
    %40 = vector.broadcast %39 : vector<128x1xf32> to vector<128x128xf32>
    %41 = arith.subf %37, %40 : vector<128x128xf32>
    %42 = math.exp %41 : vector<128x128xf32>
    %cst_27 = arith.constant dense<0.000000e+00> : vector<128xf32>
    %43 = vector.multi_reduction <add>, %42, %cst_27 [1] : vector<128x128xf32> to vector<128xf32>
    %44 = vector.shape_cast %43 : vector<128xf32> to vector<128x1xf32>
    %45 = tpu.reciprocal %44 {approx = true} : vector<128x1xf32> -> vector<128x1xf32>
    %46 = vector.broadcast %45 : vector<128x1xf32> to vector<128x128xf32>
    %47 = arith.mulf %42, %46 : vector<128x128xf32>
    %48 = arith.truncf %47 : vector<128x128xf32> to vector<128x128xbf16>
    %cst_28 = arith.constant dense<0.000000e+00> : vector<8x128xf32>
    %49 = tpu.matmul %34, %48, %cst_28 {dimension_numbers = #tpu.dot_dimension_numbers<[1], [1], [0], [0], [0, 0, 1, 0], [], []>} : vector<8x128xbf16>, vector<128x128xbf16>, vector<8x128xf32> -> vector<8x128xf32>
    %c8_29 = arith.constant 8 : index
    %c0_30 = arith.constant 0 : index
    %50 = vector.load %arg11[%c8_29, %c0_30] : memref<32x128xf32, #tpu.memory_space<vmem>>, vector<8x128xf32>
    tpu.vector_store %arg11[%c8_29, %c0_30], %49 {strides = array<i32>} : memref<32x128xf32, #tpu.memory_space<vmem>>, vector<8x128xf32>,
    %51 = vector.extract_strided_slice %7 {offsets = [16, 0], sizes = [8, 128], strides = [1, 1]} : vector<32x128xbf16> to vector<8x128xbf16>
    %c0_31 = arith.constant 0 : index
    %c16 = arith.constant 16 : index
    %c0_32 = arith.constant 0 : index
    %52 = vector.load %arg3[%c0_31, %c16, %c0_32] : memref<1x32x128xbf16, #tpu.memory_space<vmem>>, vector<1x8x128xbf16>
    %53 = vector.shape_cast %52 : vector<1x8x128xbf16> to vector<8x128xbf16>
    %c0_33 = arith.constant 0 : index
    %c16_34 = arith.constant 16 : index
    %c0_35 = arith.constant 0 : index
    %54 = vector.load %arg4[%c0_33, %c16_34, %c0_35] : memref<1x32x128xbf16, #tpu.memory_space<vmem>>, vector<1x8x128xbf16>
    %55 = vector.shape_cast %54 : vector<1x8x128xbf16> to vector<8x128xbf16>
    %cst_36 = arith.constant dense<0.000000e+00> : vector<128x128xf32>
    %56 = tpu.matmul %51, %53, %cst_36 {dimension_numbers = #tpu.dot_dimension_numbers<[0], [0], [1], [1], [0, 1, 1, 1], [], []>} : vector<8x128xbf16>, vector<8x128xbf16>, vector<128x128xf32> -> vector<128x128xf32>
    %57 = vector.broadcast %8 : vector<1x128xf32> to vector<128x128xf32>
    %58 = arith.addf %56, %57 : vector<128x128xf32>
    %cst_37 = arith.constant dense<0xFF800000> : vector<128xf32>
    %59 = vector.multi_reduction <maximumf>, %58, %cst_37 [1] : vector<128x128xf32> to vector<128xf32>
    %60 = vector.shape_cast %59 : vector<128xf32> to vector<128x1xf32>
    %61 = vector.broadcast %60 : vector<128x1xf32> to vector<128x128xf32>
    %62 = arith.subf %58, %61 : vector<128x128xf32>
    %63 = math.exp %62 : vector<128x128xf32>
    %cst_38 = arith.constant dense<0.000000e+00> : vector<128xf32>
    %64 = vector.multi_reduction <add>, %63, %cst_38 [1] : vector<128x128xf32> to vector<128xf32>
    %65 = vector.shape_cast %64 : vector<128xf32> to vector<128x1xf32>
    %66 = tpu.reciprocal %65 {approx = true} : vector<128x1xf32> -> vector<128x1xf32>
    %67 = vector.broadcast %66 : vector<128x1xf32> to vector<128x128xf32>
    %68 = arith.mulf %63, %67 : vector<128x128xf32>
    %69 = arith.truncf %68 : vector<128x128xf32> to vector<128x128xbf16>
    %cst_39 = arith.constant dense<0.000000e+00> : vector<8x128xf32>
    %70 = tpu.matmul %55, %69, %cst_39 {dimension_numbers = #tpu.dot_dimension_numbers<[1], [1], [0], [0], [0, 0, 1, 0], [], []>} : vector<8x128xbf16>, vector<128x128xbf16>, vector<8x128xf32> -> vector<8x128xf32>
    %c16_40 = arith.constant 16 : index
    %c0_41 = arith.constant 0 : index
    %71 = vector.load %arg11[%c16_40, %c0_41] : memref<32x128xf32, #tpu.memory_space<vmem>>, vector<8x128xf32>
    tpu.vector_store %arg11[%c16_40, %c0_41], %70 {strides = array<i32>} : memref<32x128xf32, #tpu.memory_space<vmem>>, vector<8x128xf32>,
    %72 = vector.extract_strided_slice %7 {offsets = [24, 0], sizes = [8, 128], strides = [1, 1]} : vector<32x128xbf16> to vector<8x128xbf16>
    %c0_42 = arith.constant 0 : index
    %c24 = arith.constant 24 : index
    %c0_43 = arith.constant 0 : index
    %73 = vector.load %arg3[%c0_42, %c24, %c0_43] : memref<1x32x128xbf16, #tpu.memory_space<vmem>>, vector<1x8x128xbf16>
    %74 = vector.shape_cast %73 : vector<1x8x128xbf16> to vector<8x128xbf16>
    %c0_44 = arith.constant 0 : index
    %c24_45 = arith.constant 24 : index
    %c0_46 = arith.constant 0 : index
    %75 = vector.load %arg4[%c0_44, %c24_45, %c0_46] : memref<1x32x128xbf16, #tpu.memory_space<vmem>>, vector<1x8x128xbf16>
    %76 = vector.shape_cast %75 : vector<1x8x128xbf16> to vector<8x128xbf16>
    %cst_47 = arith.constant dense<0.000000e+00> : vector<128x128xf32>
    %77 = tpu.matmul %72, %74, %cst_47 {dimension_numbers = #tpu.dot_dimension_numbers<[0], [0], [1], [1], [0, 1, 1, 1], [], []>} : vector<8x128xbf16>, vector<8x128xbf16>, vector<128x128xf32> -> vector<128x128xf32>
    %78 = vector.broadcast %8 : vector<1x128xf32> to vector<128x128xf32>
    %79 = arith.addf %77, %78 : vector<128x128xf32>
    %cst_48 = arith.constant dense<0xFF800000> : vector<128xf32>
    %80 = vector.multi_reduction <maximumf>, %79, %cst_48 [1] : vector<128x128xf32> to vector<128xf32>
    %81 = vector.shape_cast %80 : vector<128xf32> to vector<128x1xf32>
    %82 = vector.broadcast %81 : vector<128x1xf32> to vector<128x128xf32>
    %83 = arith.subf %79, %82 : vector<128x128xf32>
    %84 = math.exp %83 : vector<128x128xf32>
    %cst_49 = arith.constant dense<0.000000e+00> : vector<128xf32>
    %85 = vector.multi_reduction <add>, %84, %cst_49 [1] : vector<128x128xf32> to vector<128xf32>
    %86 = vector.shape_cast %85 : vector<128xf32> to vector<128x1xf32>
    %87 = tpu.reciprocal %86 {approx = true} : vector<128x1xf32> -> vector<128x1xf32>
    %88 = vector.broadcast %87 : vector<128x1xf32> to vector<128x128xf32>
    %89 = arith.mulf %84, %88 : vector<128x128xf32>
    %90 = arith.truncf %89 : vector<128x128xf32> to vector<128x128xbf16>
    %cst_50 = arith.constant dense<0.000000e+00> : vector<8x128xf32>
    %91 = tpu.matmul %76, %90, %cst_50 {dimension_numbers = #tpu.dot_dimension_numbers<[1], [1], [0], [0], [0, 0, 1, 0], [], []>} : vector<8x128xbf16>, vector<128x128xbf16>, vector<8x128xf32> -> vector<8x128xf32>
    %c24_51 = arith.constant 24 : index
    %c0_52 = arith.constant 0 : index
    %92 = vector.load %arg11[%c24_51, %c0_52] : memref<32x128xf32, #tpu.memory_space<vmem>>, vector<8x128xf32>
    tpu.vector_store %arg11[%c24_51, %c0_52], %91 {strides = array<i32>} : memref<32x128xf32, #tpu.memory_space<vmem>>, vector<8x128xf32>,
    %c0_53 = arith.constant 0 : index
    %c0_54 = arith.constant 0 : index
    %93 = vector.load %arg11[%c0_53, %c0_54] : memref<32x128xf32, #tpu.memory_space<vmem>>, vector<32x128xf32>
    %94 = arith.truncf %93 : vector<32x128xf32> to vector<32x128xbf16>
    %c0_55 = arith.constant 0 : index
    %c0_56 = arith.constant 0 : index
    %95 = vector.load %arg8[%c0_55, %c0_56] : memref<32x32xbf16, #tpu.memory_space<vmem>>, vector<32x32xbf16>
    %cst_57 = arith.constant dense<0.000000e+00> : vector<32x128xf32>
    %96 = tpu.matmul %95, %94, %cst_57 {dimension_numbers = #tpu.dot_dimension_numbers<[1], [0], [0], [1], [0, 0, 1, 1], [], []>} : vector<32x32xbf16>, vector<32x128xbf16>, vector<32x128xf32> -> vector<32x128xf32>
    %c0_58 = arith.constant 0 : index
    %c0_59 = arith.constant 0 : index
    %97 = vector.load %arg9[%c0_58, %c0_59] : memref<32x1xf32, #tpu.memory_space<vmem>>, vector<32x1xf32>
    %98 = vector.broadcast %97 : vector<32x1xf32> to vector<32x128xf32>
    %99 = arith.addf %96, %98 : vector<32x128xf32>
    %c0_60 = arith.constant 0 : index
    %c0_61 = arith.constant 0 : index
    %c0_62 = arith.constant 0 : index
    %100 = vector.load %arg10[%c0_60, %c0_61, %c0_62] : memref<1x32x128xf32, #tpu.memory_space<vmem>>, vector<1x32x128xf32>
    %101 = vector.shape_cast %100 : vector<1x32x128xf32> to vector<32x128xf32>
    %102 = vector.shape_cast %99 : vector<32x128xf32> to vector<1x32x128xf32>
    tpu.vector_store %arg10[%c0_60, %c0_61, %c0_62], %102 {strides = array<i32>} : memref<1x32x128xf32, #tpu.memory_space<vmem>>, vector<1x32x128xf32>,
    return
  }
  func.func @transform_0(%arg0: i32, %arg1: i32) -> (i32, i32, i32) {
    %c0_i32 = arith.constant 0 : i32
    %c0_i32_0 = arith.constant 0 : i32
    return %arg0, %c0_i32, %arg1 : i32, i32, i32
  }
  func.func @transform_1(%arg0: i32, %arg1: i32) -> (i32, i32, i32) {
    %c0_i32 = arith.constant 0 : i32
    %c0_i32_0 = arith.constant 0 : i32
    %c0_i32_1 = arith.constant 0 : i32
    return %arg0, %c0_i32, %c0_i32_0 : i32, i32, i32
  }
  func.func @transform_2(%arg0: i32, %arg1: i32) -> (i32, i32, i32) {
    %c0_i32 = arith.constant 0 : i32
    %c0_i32_0 = arith.constant 0 : i32
    %c0_i32_1 = arith.constant 0 : i32
    return %arg0, %c0_i32, %c0_i32_0 : i32, i32, i32
  }
  func.func @transform_3(%arg0: i32, %arg1: i32) -> (i32, i32) {
    %c0_i32 = arith.constant 0 : i32
    %c0_i32_0 = arith.constant 0 : i32
    %c0_i32_1 = arith.constant 0 : i32
    return %c0_i32, %c0_i32_0 : i32, i32
  }
  func.func @transform_4(%arg0: i32, %arg1: i32) -> (i32, i32) {
    %c0_i32 = arith.constant 0 : i32
    %c0_i32_0 = arith.constant 0 : i32
    %c0_i32_1 = arith.constant 0 : i32
    return %c0_i32, %c0_i32_0 : i32, i32
  }
  func.func @transform_5(%arg0: i32, %arg1: i32) -> (i32, i32) {
    %c0_i32 = arith.constant 0 : i32
    %c0_i32_0 = arith.constant 0 : i32
    %c0_i32_1 = arith.constant 0 : i32
    return %c0_i32, %c0_i32_0 : i32, i32
  }
  func.func @transform_6(%arg0: i32, %arg1: i32) -> (i32, i32) {
    %c0_i32 = arith.constant 0 : i32
    %c0_i32_0 = arith.constant 0 : i32
    %c0_i32_1 = arith.constant 0 : i32
    return %c0_i32, %c0_i32_0 : i32, i32
  }
  func.func @transform_7(%arg0: i32, %arg1: i32) -> (i32, i32) {
    %c0_i32 = arith.constant 0 : i32
    %c0_i32_0 = arith.constant 0 : i32
    %c0_i32_1 = arith.constant 0 : i32
    return %c0_i32, %c0_i32_0 : i32, i32
  }
  func.func @transform_8(%arg0: i32, %arg1: i32) -> (i32, i32, i32) {
    %c0_i32 = arith.constant 0 : i32
    %c0_i32_0 = arith.constant 0 : i32
    return %arg0, %c0_i32, %arg1 : i32, i32, i32
  }
}

</mosaic_0001>

<llo_original>
// kernel: tpu_custom_call.1
$region0: #{tpu_custom_call.1}
  #allocation0 [shape = 'u32[]', space=smem, size = 0x4, offset = 0x4, fixed_abs, tag = 'smem constant byte address 0x4 - core index']
  #allocation1 [shape = 'u32[144,128]{1,0:T(1,128)}', space=vmem, size = 0x12000, scoped, tag = 'internal scratch']
  #allocation2 [shape = 'f32[32,128]{1,0:T(8,128)}', space=vmem, size = 0x4000, scoped, tag = 'scratch operand']
  %s0 = inlined_call_operand.vmem [shape: bf16[2,32,128], index: 0, kind: input, shape index: {}]
  %s1 = inlined_call_operand.vmem [shape: bf16[2,32,128], index: 1, kind: input, shape index: {}]
  %s2 = inlined_call_operand.hbm [shape: bf16[2,32,128], index: 2, kind: input, shape index: {}]
  %s3 = inlined_call_operand.vmem [shape: f32[1,128], index: 3, kind: input, shape index: {}]
  %s4 = inlined_call_operand.vmem [shape: bf16[32,32], index: 4, kind: input, shape index: {}]
  %s5 = inlined_call_operand.vmem [shape: f32[32,1], index: 5, kind: input, shape index: {}]
  %s6 = inlined_call_operand.hbm [shape: bf16[32,32], index: 6, kind: input, shape index: {}]
  %s7 = inlined_call_operand.vmem [shape: f32[32,1], index: 7, kind: input, shape index: {}]
  %s8 = inlined_call_operand.hbm [shape: f32[2,32,128], index: 8, kind: output, shape index: {}]
  %s9 = sld [smem:[#allocation0]]
  $region73: #{tpu_custom_call.1} parent=0
    _
  %s11 = ssub.s32 1, %s9
  %s12 = scalar_select 0, %s11, %s9
  $region1: #{tpu_custom_call.1} parent=0
    #allocation3 [shape = 'u8[16384]{0}', space=vmem, size = 0x4000, scoped, tag = 'input window, operand 2']
    #allocation4 [shape = 's32[2]{0}', space=sflag, size = 0x8, scoped, tag = 'scoped memory for tpu_custom_call.1']
    #allocation5 [shape = 's32[2]{0}', space=sflag, size = 0x8, scoped, tag = 'scoped memory for tpu_custom_call.1']
    #allocation6 [shape = 'u8[8192]{0}', space=vmem, size = 0x2000, scoped, tag = 'input window, operand 6, single buffered']
    #allocation7 [shape = 's32[1]{0}', space=sflag, size = 0x4, scoped, tag = 'scoped memory for tpu_custom_call.1']
    #allocation8 [shape = 'u8[32768]{0}', space=vmem, size = 0x8000, scoped, tag = 'output window, operand 0']
    %13 = vsyncpa [#allocation4], 0
    %s14 = scalar_lea.sflag [#allocation4], 1
    %15 = vsyncpa %s14, 0
    %16 = vsyncpa [#allocation7], 0
    %17 = vsyncpa [#allocation5], 0
    %s18 = scalar_lea.sflag [#allocation5], 1
    %19 = vsyncpa %s18, 0
    loop: start=0, step=1, limit=4
    $region2: #{tpu_custom_call.1} parent=1 // loop_pre_header
      _
    $region3: #{tpu_custom_call.1} parent=1 // loop_header
      %s21 = sphi 0, %s25
      %p22 = scmp.ge.s32.totalorder %s21, 4
      %s28 = sphi 0, %s40
      %s29 = sphi 0, %s36
      %s30 = sphi 0, %s28
      %s31 = sphi 0, %s29
      %s32 = sphi 0, %s30
      %s33 = sphi 0, %s31
      %s45 = sphi 0, %s47
      %s48 = sphi 0, %s45
      %s49 = sphi 0, %s48
      %s65 = sphi 0, %s49
      %s71 = sphi 0, %s73
      %s74 = sphi 0, %s71
      %s75 = sphi 0, %s74
      %s91 = sphi 0, %s75
      %s97 = sphi 0, %s99
      %s100 = sphi 0, %s97
      %s101 = sphi 0, %s100
      %s117 = sphi 0, %s101
      %s121 = sphi 0, %s121
      %s123 = sphi 0, %s121
      %s124 = sphi 0, %s123
      %s138 = sphi 0, %s124
      %s142 = sphi 0, %s142
      %s144 = sphi 0, %s142
      %s145 = sphi 0, %s144
      %s159 = sphi 0, %s145
      %s163 = sphi 0, %s163
      %s165 = sphi 0, %s163
      %s166 = sphi 0, %s165
      %s180 = sphi 0, %s166
      %s184 = sphi 0, %s184
      %s186 = sphi 0, %s184
      %s187 = sphi 0, %s186
      %s201 = sphi 0, %s187
      %s205 = sphi 0, %s205
      %s207 = sphi 0, %s205
      %s208 = sphi 0, %s207
      %s222 = sphi 0, %s208
      %s230 = sphi 0, %s232
      %s233 = sphi 0, %s230
      %s234 = sphi 0, %s233
      %s250 = sphi 0, %s234
    $region4: #{tpu_custom_call.1} parent=1 // loop_header_branch
      %24 = sbr.rel (%p22) target = $region8
    $region5: #{tpu_custom_call.1} parent=1 // loop_body
      %s26 = ssub.s32 %s21, 1
      %s27 = ssub.s32 %s21, 2
      %s34 = sadd.s32 1, %s29
      %p35 = scmp.ge.s32.totalorder %s34, 1
      %s36 = scalar_select %p35, 0, %s34
      %s37 = sadd.s32 1, %s28
      %s38 = scalar_select %p35, %s37, %s28
      %p39 = scmp.ge.s32.totalorder %s38, 2
      %s40 = scalar_select %p39, 0, %s38
      %s41 = ssub.s32 %s28, %s40
      %s42 = ssub.s32 %s29, %s36
      %s43 = sor.u32 %s41, %s42
      %p44 = scmp.eq.s32.totalorder %s43, 0
      %s46 = sadd.s32 %s45, 1
      %s47 = scalar_select %p44, %s45, %s46
      %p50 = pneg %p44
      %p51 = scmp.eq.s32.totalorder %s21, 1
      %p52 = por %p50, %p51
      %p53 = scmp.ne.s32.totalorder %s45, %s48
      %p54 = scmp.eq.s32.totalorder %s21, 0
      %p55 = por %p53, %p54
      %p56 = scmp.ne.s32.totalorder %s45, %s48
      %p57 = scmp.eq.s32.totalorder %s26, 1
      %p58 = por %p56, %p57
      %p59 = scmp.ne.s32.totalorder %s48, %s49
      %p60 = scmp.eq.s32.totalorder %s26, 0
      %p61 = por %p59, %p60
      %p62 = scmp.ne.s32.totalorder %s48, %s49
      %p63 = scmp.eq.s32.totalorder %s27, 1
      %p64 = por %p62, %p63
      %p66 = scmp.ne.s32.totalorder %s49, %s65
      %p67 = scmp.eq.s32.totalorder %s27, 0
      %p68 = por %p66, %p67
      %s69 = ssub.s32 %s28, %s40
      %p70 = scmp.eq.s32.totalorder %s69, 0
      %s72 = sadd.s32 %s71, 1
      %s73 = scalar_select %p70, %s71, %s72
      %p76 = pneg %p70
      %p77 = scmp.eq.s32.totalorder %s21, 1
      %p78 = por %p76, %p77
      %p79 = scmp.ne.s32.totalorder %s71, %s74
      %p80 = scmp.eq.s32.totalorder %s21, 0
      %p81 = por %p79, %p80
      %p82 = scmp.ne.s32.totalorder %s71, %s74
      %p83 = scmp.eq.s32.totalorder %s26, 1
      %p84 = por %p82, %p83
      %p85 = scmp.ne.s32.totalorder %s74, %s75
      %p86 = scmp.eq.s32.totalorder %s26, 0
      %p87 = por %p85, %p86
      %p88 = scmp.ne.s32.totalorder %s74, %s75
      %p89 = scmp.eq.s32.totalorder %s27, 1
      %p90 = por %p88, %p89
      %p92 = scmp.ne.s32.totalorder %s75, %s91
      %p93 = scmp.eq.s32.totalorder %s27, 0
      %p94 = por %p92, %p93
      %s95 = ssub.s32 %s28, %s40
      %p96 = scmp.eq.s32.totalorder %s95, 0
      %s98 = sadd.s32 %s97, 1
      %s99 = scalar_select %p96, %s97, %s98
      %p102 = pneg %p96
      %p103 = scmp.eq.s32.totalorder %s21, 1
      %p104 = por %p102, %p103
      %p105 = scmp.ne.s32.totalorder %s97, %s100
      %p106 = scmp.eq.s32.totalorder %s21, 0
      %p107 = por %p105, %p106
      %p108 = scmp.ne.s32.totalorder %s97, %s100
      %p109 = scmp.eq.s32.totalorder %s26, 1
      %p110 = por %p108, %p109
      %p111 = scmp.ne.s32.totalorder %s100, %s101
      %p112 = scmp.eq.s32.totalorder %s26, 0
      %p113 = por %p111, %p112
      %p114 = scmp.ne.s32.totalorder %s100, %s101
      %p115 = scmp.eq.s32.totalorder %s27, 1
      %p116 = por %p114, %p115
      %p118 = scmp.ne.s32.totalorder %s101, %s117
      %p119 = scmp.eq.s32.totalorder %s27, 0
      %p120 = por %p118, %p119
      %s122 = sadd.s32 %s121, 1
      %p125 = scmp.eq.s32.totalorder %s21, 1
      %p126 = scmp.ne.s32.totalorder %s121, %s123
      %p127 = scmp.eq.s32.totalorder %s21, 0
      %p128 = por %p126, %p127
      %p129 = scmp.ne.s32.totalorder %s121, %s123
      %p130 = scmp.eq.s32.totalorder %s26, 1
      %p131 = por %p129, %p130
      %p132 = scmp.ne.s32.totalorder %s123, %s124
      %p133 = scmp.eq.s32.totalorder %s26, 0
      %p134 = por %p132, %p133
      %p135 = scmp.ne.s32.totalorder %s123, %s124
      %p136 = scmp.eq.s32.totalorder %s27, 1
      %p137 = por %p135, %p136
      %p139 = scmp.ne.s32.totalorder %s124, %s138
      %p140 = scmp.eq.s32.totalorder %s27, 0
      %p141 = por %p139, %p140
      %s143 = sadd.s32 %s142, 1
      %p146 = scmp.eq.s32.totalorder %s21, 1
      %p147 = scmp.ne.s32.totalorder %s142, %s144
      %p148 = scmp.eq.s32.totalorder %s21, 0
      %p149 = por %p147, %p148
      %p150 = scmp.ne.s32.totalorder %s142, %s144
      %p151 = scmp.eq.s32.totalorder %s26, 1
      %p152 = por %p150, %p151
      %p153 = scmp.ne.s32.totalorder %s144, %s145
      %p154 = scmp.eq.s32.totalorder %s26, 0
      %p155 = por %p153, %p154
      %p156 = scmp.ne.s32.totalorder %s144, %s145
      %p157 = scmp.eq.s32.totalorder %s27, 1
      %p158 = por %p156, %p157
      %p160 = scmp.ne.s32.totalorder %s145, %s159
      %p161 = scmp.eq.s32.totalorder %s27, 0
      %p162 = por %p160, %p161
      %s164 = sadd.s32 %s163, 1
      %p167 = scmp.eq.s32.totalorder %s21, 1
      %p168 = scmp.ne.s32.totalorder %s163, %s165
      %p169 = scmp.eq.s32.totalorder %s21, 0
      %p170 = por %p168, %p169
      %p171 = scmp.ne.s32.totalorder %s163, %s165
      %p172 = scmp.eq.s32.totalorder %s26, 1
      %p173 = por %p171, %p172
      %p174 = scmp.ne.s32.totalorder %s165, %s166
      %p175 = scmp.eq.s32.totalorder %s26, 0
      %p176 = por %p174, %p175
      %p177 = scmp.ne.s32.totalorder %s165, %s166
      %p178 = scmp.eq.s32.totalorder %s27, 1
      %p179 = por %p177, %p178
      %p181 = scmp.ne.s32.totalorder %s166, %s180
      %p182 = scmp.eq.s32.totalorder %s27, 0
      %p183 = por %p181, %p182
      %s185 = sadd.s32 %s184, 1
      %p188 = scmp.eq.s32.totalorder %s21, 1
      %p189 = scmp.ne.s32.totalorder %s184, %s186
      %p190 = scmp.eq.s32.totalorder %s21, 0
      %p191 = por %p189, %p190
      %p192 = scmp.ne.s32.totalorder %s184, %s186
      %p193 = scmp.eq.s32.totalorder %s26, 1
      %p194 = por %p192, %p193
      %p195 = scmp.ne.s32.totalorder %s186, %s187
      %p196 = scmp.eq.s32.totalorder %s26, 0
      %p197 = por %p195, %p196
      %p198 = scmp.ne.s32.totalorder %s186, %s187
      %p199 = scmp.eq.s32.totalorder %s27, 1
      %p200 = por %p198, %p199
      %p202 = scmp.ne.s32.totalorder %s187, %s201
      %p203 = scmp.eq.s32.totalorder %s27, 0
      %p204 = por %p202, %p203
      %s206 = sadd.s32 %s205, 1
      %p209 = scmp.eq.s32.totalorder %s21, 1
      %p210 = scmp.ne.s32.totalorder %s205, %s207
      %p211 = scmp.eq.s32.totalorder %s21, 0
      %p212 = por %p210, %p211
      %p213 = scmp.ne.s32.totalorder %s205, %s207
      %p214 = scmp.eq.s32.totalorder %s26, 1
      %p215 = por %p213, %p214
      %p216 = scmp.ne.s32.totalorder %s207, %s208
      %p217 = scmp.eq.s32.totalorder %s26, 0
      %p218 = por %p216, %p217
      %p219 = scmp.ne.s32.totalorder %s207, %s208
      %p220 = scmp.eq.s32.totalorder %s27, 1
      %p221 = por %p219, %p220
      %p223 = scmp.ne.s32.totalorder %s208, %s222
      %p224 = scmp.eq.s32.totalorder %s27, 0
      %p225 = por %p223, %p224
      %s226 = ssub.s32 %s28, %s40
      %s227 = ssub.s32 %s29, %s36
      %s228 = sor.u32 %s226, %s227
      %p229 = scmp.eq.s32.totalorder %s228, 0
      %s231 = sadd.s32 %s230, 1
      %s232 = scalar_select %p229, %s230, %s231
      %p235 = pneg %p229
      %p236 = scmp.eq.s32.totalorder %s21, 1
      %p237 = por %p235, %p236
      %p238 = scmp.ne.s32.totalorder %s230, %s233
      %p239 = scmp.eq.s32.totalorder %s21, 0
      %p240 = por %p238, %p239
      %p241 = scmp.ne.s32.totalorder %s230, %s233
      %p242 = scmp.eq.s32.totalorder %s26, 1
      %p243 = por %p241, %p242
      %p244 = scmp.ne.s32.totalorder %s233, %s234
      %p245 = scmp.eq.s32.totalorder %s26, 0
      %p246 = por %p244, %p245
      %p247 = scmp.ne.s32.totalorder %s233, %s234
      %p248 = scmp.eq.s32.totalorder %s27, 1
      %p249 = por %p247, %p248
      %p251 = scmp.ne.s32.totalorder %s234, %s250
      %p252 = scmp.eq.s32.totalorder %s27, 0
      %p253 = por %p251, %p252
      %p254 = scmp.le.s32.totalorder 1, %s21
      %p255 = scmp.lt.s32.totalorder %s21, 3
      %p256 = pnand %p254, %p255
      %p257 = pneg %p256
      // Predicated region
      $region9: #{tpu_custom_call.1} parent=5 // pred_check
        _
      $region10: #{tpu_custom_call.1} parent=5 // pred_check_branch
        %259 = sbr.rel (%p256) target = $region12
      $region11: #{tpu_custom_call.1} parent=5 // pred_region
        %s260 = ssub.s32 %s21, 1
        // Predicated region
        $region13: #{tpu_custom_call.1} parent=11 // pred_check
          %p261 = pneg %p134
        $region14: #{tpu_custom_call.1} parent=11 // pred_check_branch
          %263 = sbr.rel (%p261) target = $region16
        $region15: #{tpu_custom_call.1} parent=11 // pred_region
          _
        $region16: #{tpu_custom_call.1} parent=11 // pred_fallthru
          _
        // Predicated region
        $region17: #{tpu_custom_call.1} parent=11 // pred_check
          %p264 = pneg %p155
        $region18: #{tpu_custom_call.1} parent=11 // pred_check_branch
          %266 = sbr.rel (%p264) target = $region20
        $region19: #{tpu_custom_call.1} parent=11 // pred_region
          _
        $region20: #{tpu_custom_call.1} parent=11 // pred_fallthru
          _
        // Predicated region
        $region21: #{tpu_custom_call.1} parent=11 // pred_check
          %p267 = pneg %p176
        $region22: #{tpu_custom_call.1} parent=11 // pred_check_branch
          %269 = sbr.rel (%p267) target = $region24
        $region23: #{tpu_custom_call.1} parent=11 // pred_region
          _
        $region24: #{tpu_custom_call.1} parent=11 // pred_fallthru
          _
        // Predicated region
        $region25: #{tpu_custom_call.1} parent=11 // pred_check
          %p270 = pneg %p197
        $region26: #{tpu_custom_call.1} parent=11 // pred_check_branch
          %272 = sbr.rel (%p270) target = $region28
        $region27: #{tpu_custom_call.1} parent=11 // pred_region
          %s274 = ssub.s32 256, 256
          %275 = vsyncadd [#allocation7], %s274
          %s276 = sshll.u32 [#allocation6], 4
          %s277 = int_to_ptr.vmem [resolvable:$true] %s276
          %282 = dma.hbm_to_vmem [thread:$0]  %s6, 256, %s277, [#allocation7], 64, 64, 4
        $region28: #{tpu_custom_call.1} parent=11 // pred_fallthru
          _
        // Predicated region
        $region29: #{tpu_custom_call.1} parent=11 // pred_check
          %p283 = pneg %p218
        $region30: #{tpu_custom_call.1} parent=11 // pred_check_branch
          %285 = sbr.rel (%p283) target = $region32
        $region31: #{tpu_custom_call.1} parent=11 // pred_region
          _
        $region32: #{tpu_custom_call.1} parent=11 // pred_fallthru
          _
      $region12: #{tpu_custom_call.1} parent=5 // pred_fallthru
        _
      %p286 = scmp.lt.s32.totalorder %s21, 2
      // Predicated region
      $region33: #{tpu_custom_call.1} parent=5 // pred_check
        %p287 = pneg %p286
      $region34: #{tpu_custom_call.1} parent=5 // pred_check_branch
        %289 = sbr.rel (%p287) target = $region36
      $region35: #{tpu_custom_call.1} parent=5 // pred_region
        // Predicated region
        $region37: #{tpu_custom_call.1} parent=35 // pred_check
          %p290 = pneg %p55
        $region38: #{tpu_custom_call.1} parent=35 // pred_check_branch
          %292 = sbr.rel (%p290) target = $region40
        $region39: #{tpu_custom_call.1} parent=35 // pred_region
          %p293 = scmp.lt.s32.totalorder %s28, 1
          %s294 = scalar_select %p293, %s28, 1
          %p295 = scmp.lt.s32.totalorder %s29, 0
          %s296 = scalar_select %p295, %s29, 0
          %s297 = smul.addr %s294, 4
          %s298 = sadd.s32 %s296, %s297
          %s299 = smul.addr %s298, 4
          %s300 = scalar_lea.vmem %s0, %s299
        $region40: #{tpu_custom_call.1} parent=35 // pred_fallthru
          _
        // Predicated region
        $region41: #{tpu_custom_call.1} parent=35 // pred_check
          %p301 = pneg %p81
        $region42: #{tpu_custom_call.1} parent=35 // pred_check_branch
          %303 = sbr.rel (%p301) target = $region44
        $region43: #{tpu_custom_call.1} parent=35 // pred_region
          %p304 = scmp.lt.s32.totalorder %s28, 1
          %s305 = scalar_select %p304, %s28, 1
          %s306 = smul.addr %s305, 4
          %s307 = smul.addr %s306, 4
          %s308 = scalar_lea.vmem %s1, %s307
        $region44: #{tpu_custom_call.1} parent=35 // pred_fallthru
          _
        // Predicated region
        $region45: #{tpu_custom_call.1} parent=35 // pred_check
          %p309 = pneg %p107
        $region46: #{tpu_custom_call.1} parent=35 // pred_check_branch
          %311 = sbr.rel (%p309) target = $region48
        $region47: #{tpu_custom_call.1} parent=35 // pred_region
          %s312 = sand.u32 %s97, 1
          %s313 = scalar_lea.sflag [#allocation4], %s312
          %s314 = sand.u32 %s97, 1
          %s315 = smul.addr %s314, 16
          %s316 = scalar_lea.vmem [#allocation3], %s315
          %s318 = ssub.s32 256, 256
          %319 = vsyncadd %s313, %s318
          %s320 = smul.addr %s28, 4
          %s321 = smul.addr %s320, 64
          %s322 = scalar_lea.hbm %s2, %s321
          %s323 = sshll.u32 %s316, 4
          %s324 = int_to_ptr.vmem [resolvable:$true] %s323
          %329 = dma.hbm_to_vmem [thread:$0]  %s322, 256, %s324, %s313, 64, 64, 4
        $region48: #{tpu_custom_call.1} parent=35 // pred_fallthru
          _
      $region36: #{tpu_custom_call.1} parent=5 // pred_fallthru
        _
      %p330 = scmp.le.s32.totalorder 1, %s21
      %p331 = scmp.lt.s32.totalorder %s21, 3
      %p332 = pnand %p330, %p331
      %p333 = pneg %p332
      // Predicated region
      $region49: #{tpu_custom_call.1} parent=5 // pred_check
        _
      $region50: #{tpu_custom_call.1} parent=5 // pred_check_branch
        %335 = sbr.rel (%p332) target = $region52
      $region51: #{tpu_custom_call.1} parent=5 // pred_region
        %s336 = ssub.s32 %s21, 1
        %s337 = sand.u32 %s100, 1
        %s338 = scalar_lea.sflag [#allocation4], %s337
        %s339 = sand.u32 %s100, 1
        %s340 = smul.addr %s339, 16
        %s341 = scalar_lea.vmem [#allocation3], %s340
        // Predicated region
        $region53: #{tpu_custom_call.1} parent=51 // pred_check
          %p342 = pneg %p113
        $region54: #{tpu_custom_call.1} parent=51 // pred_check_branch
          %344 = sbr.rel (%p342) target = $region56
        $region55: #{tpu_custom_call.1} parent=51 // pred_region
          %345 = dma.done %s338, 256
        $region56: #{tpu_custom_call.1} parent=51 // pred_fallthru
          _
        // Predicated region
        $region57: #{tpu_custom_call.1} parent=51 // pred_check
          %p346 = pneg %p197
        $region58: #{tpu_custom_call.1} parent=51 // pred_check_branch
          %348 = sbr.rel (%p346) target = $region60
        $region59: #{tpu_custom_call.1} parent=51 // pred_region
          %349 = dma.done [#allocation7], 256
        $region60: #{tpu_custom_call.1} parent=51 // pred_fallthru
          _
        %p350 = scmp.lt.s32.totalorder %s30, 1
        %s351 = scalar_select %p350, %s30, 1
        %p352 = scmp.lt.s32.totalorder %s31, 0
        %s353 = scalar_select %p352, %s31, 0
        %s354 = smul.addr %s351, 4
        %s355 = sadd.s32 %s353, %s354
        %s356 = smul.addr %s355, 4
        %s357 = scalar_lea.vmem %s0, %s356
        %p358 = pneg %p61
        %p359 = pneg %p58
        %p360 = scmp.lt.s32.totalorder %s30, 1
        %s361 = scalar_select %p360, %s30, 1
        %s362 = smul.addr %s361, 4
        %s363 = smul.addr %s362, 4
        %s364 = scalar_lea.vmem %s1, %s363
        %p365 = pneg %p87
        %p366 = pneg %p84
        %s367 = sand.u32 %s100, 1
        %s368 = scalar_lea.sflag [#allocation4], %s367
        %s369 = sand.u32 %s100, 1
        %s370 = smul.addr %s369, 16
        %s371 = scalar_lea.vmem [#allocation3], %s370
        %p372 = pneg %p113
        %p373 = pneg %p110
        %p374 = pneg %p134
        %p375 = pneg %p131
        %p376 = pneg %p155
        %p377 = pneg %p152
        %p378 = pneg %p176
        %p379 = pneg %p173
        %p380 = pneg %p197
        %p381 = pneg %p194
        %p382 = pneg %p218
        %p383 = pneg %p215
        %p384 = pneg %p246
        %p385 = pneg %p243
        %s386 = sand.u32 %s233, 1
        %s387 = scalar_lea.sflag [#allocation5], %s386
        %s388 = sand.u32 %s233, 1
        %s389 = smul.addr %s388, 32
        %s390 = scalar_lea.vmem [#allocation8], %s389
        %p391 = scmp.lt.s32.totalorder %s30, 1
        %s392 = scalar_select %p391, %s30, 1
        %p393 = scmp.lt.s32.totalorder %s31, 0
        %s394 = scalar_select %p393, %s31, 0
        %s395 = smul.addr %s392, 4
        %s396 = sadd.s32 %s394, %s395
        %s397 = smul.addr %s396, 4
        %s398 = scalar_lea.vmem %s0, %s397
        %p399 = scmp.lt.s32.totalorder %s30, 1
        %s400 = scalar_select %p399, %s30, 1
        %s401 = smul.addr %s400, 4
        %s402 = smul.addr %s401, 4
        %s403 = scalar_lea.vmem %s1, %s402
        %v405 = vld [vmem:[%s4] sm:$0xf]
        %v406 = vld [vmem:[%s4 + $0x4] sm:$0xf]
        %v407 = vld [vmem:[%s4 + $0x8] sm:$0xf]
        %v408 = vld [vmem:[%s4 + $0xc] sm:$0xf]
        %v409 = vld [vmem:[%s398] sm:$0xf]
        %v410 = vld [vmem:[%s398 + $0x4] sm:$0xf]
        %v411 = vld [vmem:[%s398 + $0x8] sm:$0xf]
        %v412 = vld [vmem:[%s398 + $0xc] sm:$0xf]
        %v413 = vld [vmem:[%s5] sm:$0xff]
        %v414 = vld [vmem:[%s5 + $0x8] sm:$0xff]
        %v415 = vld [vmem:[%s5 + $0x10] sm:$0xff]
        %v416 = vld [vmem:[%s5 + $0x18] sm:$0xff]
        %418 = vset.pattern.permute.xlu0 0
        %419 = vperm.xlu0 %418, %v413
        %v420 = vpop.permute.xlu0 %419
        %423 = vset.pattern.permute.xlu0 0
        %424 = vperm.xlu0 %423, %v414
        %v425 = vpop.permute.xlu0 %424
        %428 = vset.pattern.permute.xlu0 0
        %429 = vperm.xlu0 %428, %v415
        %v430 = vpop.permute.xlu0 %429
        %433 = vset.pattern.permute.xlu0 0
        %434 = vperm.xlu0 %433, %v416
        %v435 = vpop.permute.xlu0 %434
        %v441 = vunpack.c.l.b16 %v405
        %v442 = vunpack.c.l.b16 %v406
        %v443 = vunpack.c.l.b16 %v407
        %v444 = vunpack.c.l.b16 %v408
        %v445 = vpack.c.b16 %v442, %v441
        %v446 = vpack.c.b16 %v444, %v443
        %v451 = vunpack.c.l.b16 %v409
        %v452 = vunpack.c.l.b16 %v410
        %v453 = vunpack.c.l.b16 %v411
        %v454 = vunpack.c.l.b16 %v412
        %v455 = vpack.c.b16 %v452, %v451
        %v456 = vpack.c.b16 %v454, %v453
        %vm459 = vcmask 261120
        %v461 = vsel %vm459, %v445, 0
        %v464 = vsel %vm459, %v446, 0
        %466 = vmatprep.subr.bf16.mxu0 0
        %467 = vmatpush1.bf16.msra.mxu0 %v455
        %468 = vmatprep.subr.bf16.mxu0 0
        %469 = vmatpush1.bf16.msra.mxu0 %v456
        %470 = vmatprep.subr.bf16.mxu0 0
        %471 = vmatpush1.bf16.msra.mxu0 0
        %472 = vmatprep.subr.bf16.mxu0 0
        %473 = vmatpush1.bf16.msra.mxu0 0
        %474 = vmatprep.subr.bf16.mxu0 0
        %475 = vmatpush1.bf16.msra.mxu0 0
        %476 = vmatprep.subr.bf16.mxu0 0
        %477 = vmatpush1.bf16.msra.mxu0 0
        %478 = vmatprep.subr.bf16.mxu0 0
        %479 = vmatpush1.bf16.msra.mxu0 0
        %480 = vmatprep.subr.bf16.mxu0 0
        %481 = vmatpush1.bf16.msra.mxu0 0
        %482 = vmatprep.subr.bf16.mxu0 0
        %483 = vmatpush1.bf16.msra.mxu0 0
        %484 = vmatprep.subr.bf16.mxu0 0
        %485 = vmatpush1.bf16.msra.mxu0 0
        %486 = vmatprep.subr.bf16.mxu0 0
        %487 = vmatpush1.bf16.msra.mxu0 0
        %488 = vmatprep.subr.bf16.mxu0 0
        %489 = vmatpush1.bf16.msra.mxu0 0
        %490 = vmatprep.subr.bf16.mxu0 0
        %491 = vmatpush1.bf16.msra.mxu0 0
        %492 = vmatprep.subr.bf16.mxu0 0
        %493 = vmatpush1.bf16.msra.mxu0 0
        %494 = vmatprep.subr.bf16.mxu0 0
        %495 = vmatpush1.bf16.msra.mxu0 0
        %496 = vmatprep.subr.bf16.mxu0 0
        %497 = vmatpush1.bf16.msra.mxu0 0
        %498 = vmatprep.mubr.bf16.mxu0 0
        %499 = vmatmul.mubr.bf16.gmra.mrb[0].mxu0 %v461
        %v500 = vpop.f32.mrb[0].mxu0
        %v501 = vadd.f32 %v420, %v500
        %v502 = vpop.f32.mrb[0].mxu0
        %v503 = vpop.f32.mrb[0].mxu0
        %v504 = vadd.f32 %v425, %v503
        %v505 = vpop.f32.mrb[0].mxu0
        %506 = vmatprep.mubr.bf16.mxu0 0
        %507 = vmatmul.mubr.bf16.gmra.mrb[0].mxu0 %v464
        %v508 = vpop.f32.mrb[0].mxu0
        %v509 = vadd.f32 %v430, %v508
        %v510 = vpop.f32.mrb[0].mxu0
        %v511 = vpop.f32.mrb[0].mxu0
        %v512 = vadd.f32 %v435, %v511
        %v513 = vpop.f32.mrb[0].mxu0
        %514 = vdwg.mxu0
        %v515 = vpack.c.bf16 %v504, %v501
        %v516 = vpack.c.bf16 %v512, %v509
        %v517 = vld [vmem:[%s3] sm:$0x1]
        %v518 = vld [vmem:[%s403] sm:$0xf]
        %v519 = vld [vmem:[%s341] sm:$0xf]
        %v521 = vlaneseq
        %v522 = vshrl.u32 %v521, 7
        %v523 = vsub.s32 0, %v522
        %v524 = vrot.slane %v517, %v523
        %526 = vxpose.xlu0.c.b16.start [1/8] %v515, 128
        %527 = vxpose.xlu0.c.b16.cont [2/8] 0, 128
        %528 = vxpose.xlu0.c.b16.cont [3/8] 0, 128
        %529 = vxpose.xlu0.c.b16.cont [4/8] 0, 128
        %530 = vxpose.xlu0.c.b16.cont [5/8] 0, 128
        %531 = vxpose.xlu0.c.b16.cont [6/8] 0, 128
        %532 = vxpose.xlu0.c.b16.cont [7/8] 0, 128
        %533 = vxpose.xlu0.c.b16.end [8/8] 0, 128
        %v534 = vpop.trf.xlu0
        %v535 = vpop.trf.xlu0
        %v536 = vpop.trf.xlu0
        %v537 = vpop.trf.xlu0
        %v538 = vpop.trf.xlu0
        %v539 = vpop.trf.xlu0
        %v540 = vpop.trf.xlu0
        %v541 = vpop.trf.xlu0
        %vm542 = vcmask 64512
        %v544 = vsel %vm542, %v534, 0
        %v547 = vsel %vm542, %v535, 0
        %v550 = vsel %vm542, %v536, 0
        %v553 = vsel %vm542, %v537, 0
        %v556 = vsel %vm542, %v538, 0
        %v559 = vsel %vm542, %v539, 0
        %v562 = vsel %vm542, %v540, 0
        %v565 = vsel %vm542, %v541, 0
        %vm567 = vcmask 1043456
        %v569 = vsel %vm567, %v518, 0
        %571 = vmatprep.subr.bf16.mxu0 0
        %572 = vmatpush1.bf16.msra.mxu0 %v569
        %573 = vmatprep.subr.bf16.mxu0 0
        %574 = vmatpush1.bf16.msra.mxu0 0
        %575 = vmatprep.subr.bf16.mxu0 0
        %576 = vmatpush1.bf16.msra.mxu0 0
        %577 = vmatprep.subr.bf16.mxu0 0
        %578 = vmatpush1.bf16.msra.mxu0 0
        %579 = vmatprep.subr.bf16.mxu0 0
        %580 = vmatpush1.bf16.msra.mxu0 0
        %581 = vmatprep.subr.bf16.mxu0 0
        %582 = vmatpush1.bf16.msra.mxu0 0
        %583 = vmatprep.subr.bf16.mxu0 0
        %584 = vmatpush1.bf16.msra.mxu0 0
        %585 = vmatprep.subr.bf16.mxu0 0
        %586 = vmatpush1.bf16.msra.mxu0 0
        %587 = vmatprep.subr.bf16.mxu0 0
        %588 = vmatpush1.bf16.msra.mxu0 0
        %589 = vmatprep.subr.bf16.mxu0 0
        %590 = vmatpush1.bf16.msra.mxu0 0
        %591 = vmatprep.subr.bf16.mxu0 0
        %592 = vmatpush1.bf16.msra.mxu0 0
        %593 = vmatprep.subr.bf16.mxu0 0
        %594 = vmatpush1.bf16.msra.mxu0 0
        %595 = vmatprep.subr.bf16.mxu0 0
        %596 = vmatpush1.bf16.msra.mxu0 0
        %597 = vmatprep.subr.bf16.mxu0 0
        %598 = vmatpush1.bf16.msra.mxu0 0
        %599 = vmatprep.subr.bf16.mxu0 0
        %600 = vmatpush1.bf16.msra.mxu0 0
        %601 = vmatprep.subr.bf16.mxu0 0
        %602 = vmatpush1.bf16.msra.mxu0 0
        %603 = vmatprep.mubr.bf16.mxu0 0
        %604 = vmatmul.mubr.bf16.gmra.mrb[0].mxu0 %v544
        %v605 = vpop.f32.mrb[0].mxu0
        %v606 = vadd.f32 %v524, %v605
        %v607 = vpop.f32.mrb[0].mxu0
        %v608 = vpop.f32.mrb[0].mxu0
        %v609 = vadd.f32 %v524, %v608
        %v610 = vpop.f32.mrb[0].mxu0
        %611 = vmatprep.mubr.bf16.mxu0 0
        %612 = vmatmul.mubr.bf16.gmra.mrb[0].mxu0 %v547
        %v613 = vpop.f32.mrb[0].mxu0
        %v614 = vadd.f32 %v524, %v613
        %v615 = vpop.f32.mrb[0].mxu0
        %v616 = vpop.f32.mrb[0].mxu0
        %v617 = vadd.f32 %v524, %v616
        %v618 = vpop.f32.mrb[0].mxu0
        %619 = vmatprep.mubr.bf16.mxu0 0
        %620 = vmatmul.mubr.bf16.gmra.mrb[0].mxu0 %v550
        %v621 = vpop.f32.mrb[0].mxu0
        %v622 = vadd.f32 %v524, %v621
        %v623 = vpop.f32.mrb[0].mxu0
        %v624 = vpop.f32.mrb[0].mxu0
        %v625 = vadd.f32 %v524, %v624
        %v626 = vpop.f32.mrb[0].mxu0
        %627 = vmatprep.mubr.bf16.mxu0 0
        %628 = vmatmul.mubr.bf16.gmra.mrb[0].mxu0 %v553
        %v629 = vpop.f32.mrb[0].mxu0
        %v630 = vadd.f32 %v524, %v629
        %v631 = vpop.f32.mrb[0].mxu0
        %v632 = vpop.f32.mrb[0].mxu0
        %v633 = vadd.f32 %v524, %v632
        %v634 = vpop.f32.mrb[0].mxu0
        %635 = vmatprep.mubr.bf16.mxu0 0
        %636 = vmatmul.mubr.bf16.gmra.mrb[0].mxu0 %v556
        %v637 = vpop.f32.mrb[0].mxu0
        %v638 = vadd.f32 %v524, %v637
        %v639 = vpop.f32.mrb[0].mxu0
        %v640 = vpop.f32.mrb[0].mxu0
        %v641 = vadd.f32 %v524, %v640
        %v642 = vpop.f32.mrb[0].mxu0
        %643 = vmatprep.mubr.bf16.mxu0 0
        %644 = vmatmul.mubr.bf16.gmra.mrb[0].mxu0 %v559
        %v645 = vpop.f32.mrb[0].mxu0
        %v646 = vadd.f32 %v524, %v645
        %v647 = vpop.f32.mrb[0].mxu0
        %v648 = vpop.f32.mrb[0].mxu0
        %v649 = vadd.f32 %v524, %v648
        %v650 = vpop.f32.mrb[0].mxu0
        %651 = vmatprep.mubr.bf16.mxu0 0
        %652 = vmatmul.mubr.bf16.gmra.mrb[0].mxu0 %v562
        %v653 = vpop.f32.mrb[0].mxu0
        %v654 = vadd.f32 %v524, %v653
        %v655 = vpop.f32.mrb[0].mxu0
        %v656 = vpop.f32.mrb[0].mxu0
        %v657 = vadd.f32 %v524, %v656
        %v658 = vpop.f32.mrb[0].mxu0
        %659 = vmatprep.mubr.bf16.mxu0 0
        %660 = vmatmul.mubr.bf16.gmra.mrb[0].mxu0 %v565
        %v661 = vpop.f32.mrb[0].mxu0
        %v662 = vadd.f32 %v524, %v661
        %v663 = vpop.f32.mrb[0].mxu0
        %v664 = vpop.f32.mrb[0].mxu0
        %v665 = vadd.f32 %v524, %v664
        %v666 = vpop.f32.mrb[0].mxu0
        %667 = vdwg.mxu0
        %668 = vmax.xlane.f32.xlu0 %v606
        %v669 = vpop.xlane.xlu0 %668
        %670 = vmax.xlane.f32.xlu0 %v609
        %v671 = vpop.xlane.xlu0 %670
        %672 = vmax.xlane.f32.xlu0 %v614
        %v673 = vpop.xlane.xlu0 %672
        %674 = vmax.xlane.f32.xlu0 %v617
        %v675 = vpop.xlane.xlu0 %674
        %676 = vmax.xlane.f32.xlu0 %v622
        %v677 = vpop.xlane.xlu0 %676
        %678 = vmax.xlane.f32.xlu0 %v625
        %v679 = vpop.xlane.xlu0 %678
        %680 = vmax.xlane.f32.xlu0 %v630
        %v681 = vpop.xlane.xlu0 %680
        %682 = vmax.xlane.f32.xlu0 %v633
        %v683 = vpop.xlane.xlu0 %682
        %684 = vmax.xlane.f32.xlu0 %v638
        %v685 = vpop.xlane.xlu0 %684
        %686 = vmax.xlane.f32.xlu0 %v641
        %v687 = vpop.xlane.xlu0 %686
        %688 = vmax.xlane.f32.xlu0 %v646
        %v689 = vpop.xlane.xlu0 %688
        %690 = vmax.xlane.f32.xlu0 %v649
        %v691 = vpop.xlane.xlu0 %690
        %692 = vmax.xlane.f32.xlu0 %v654
        %v693 = vpop.xlane.xlu0 %692
        %694 = vmax.xlane.f32.xlu0 %v657
        %v695 = vpop.xlane.xlu0 %694
        %696 = vmax.xlane.f32.xlu0 %v662
        %v697 = vpop.xlane.xlu0 %696
        %698 = vmax.xlane.f32.xlu0 %v665
        %v699 = vpop.xlane.xlu0 %698
        %v700 = vsub.f32 %v606, %v669
        %v701 = vsub.f32 %v609, %v671
        %v702 = vsub.f32 %v614, %v673
        %v703 = vsub.f32 %v617, %v675
        %v704 = vsub.f32 %v622, %v677
        %v705 = vsub.f32 %v625, %v679
        %v706 = vsub.f32 %v630, %v681
        %v707 = vsub.f32 %v633, %v683
        %v708 = vsub.f32 %v638, %v685
        %v709 = vsub.f32 %v641, %v687
        %v710 = vsub.f32 %v646, %v689
        %v711 = vsub.f32 %v649, %v691
        %v712 = vsub.f32 %v654, %v693
        %v713 = vsub.f32 %v657, %v695
        %v714 = vsub.f32 %v662, %v697
        %v715 = vsub.f32 %v665, %v699
        %v716 = vmul.f32 %v700, 1.442695
        %v717 = vpow.pop %v716
        %v718 = vmul.f32 %v701, 1.442695
        %v719 = vpow.pop %v718
        %v720 = vmul.f32 %v702, 1.442695
        %v721 = vpow.pop %v720
        %v722 = vmul.f32 %v703, 1.442695
        %v723 = vpow.pop %v722
        %v724 = vmul.f32 %v704, 1.442695
        %v725 = vpow.pop %v724
        %v726 = vmul.f32 %v705, 1.442695
        %v727 = vpow.pop %v726
        %v728 = vmul.f32 %v706, 1.442695
        %v729 = vpow.pop %v728
        %v730 = vmul.f32 %v707, 1.442695
        %v731 = vpow.pop %v730
        %v732 = vmul.f32 %v708, 1.442695
        %v733 = vpow.pop %v732
        %v734 = vmul.f32 %v709, 1.442695
        %v735 = vpow.pop %v734
        %v736 = vmul.f32 %v710, 1.442695
        %v737 = vpow.pop %v736
        %v738 = vmul.f32 %v711, 1.442695
        %v739 = vpow.pop %v738
        %v740 = vmul.f32 %v712, 1.442695
        %v741 = vpow.pop %v740
        %v742 = vmul.f32 %v713, 1.442695
        %v743 = vpow.pop %v742
        %v744 = vmul.f32 %v714, 1.442695
        %v745 = vpow.pop %v744
        %v746 = vmul.f32 %v715, 1.442695
        %v747 = vpow.pop %v746
        %748 = vadd.xlane.f32.xlu0 %v717
        %v749 = vpop.xlane.xlu0 %748
        %750 = vadd.xlane.f32.xlu0 %v719
        %v751 = vpop.xlane.xlu0 %750
        %752 = vadd.xlane.f32.xlu0 %v721
        %v753 = vpop.xlane.xlu0 %752
        %754 = vadd.xlane.f32.xlu0 %v723
        %v755 = vpop.xlane.xlu0 %754
        %756 = vadd.xlane.f32.xlu0 %v725
        %v757 = vpop.xlane.xlu0 %756
        %758 = vadd.xlane.f32.xlu0 %v727
        %v759 = vpop.xlane.xlu0 %758
        %760 = vadd.xlane.f32.xlu0 %v729
        %v761 = vpop.xlane.xlu0 %760
        %762 = vadd.xlane.f32.xlu0 %v731
        %v763 = vpop.xlane.xlu0 %762
        %764 = vadd.xlane.f32.xlu0 %v733
        %v765 = vpop.xlane.xlu0 %764
        %766 = vadd.xlane.f32.xlu0 %v735
        %v767 = vpop.xlane.xlu0 %766
        %768 = vadd.xlane.f32.xlu0 %v737
        %v769 = vpop.xlane.xlu0 %768
        %770 = vadd.xlane.f32.xlu0 %v739
        %v771 = vpop.xlane.xlu0 %770
        %772 = vadd.xlane.f32.xlu0 %v741
        %v773 = vpop.xlane.xlu0 %772
        %774 = vadd.xlane.f32.xlu0 %v743
        %v775 = vpop.xlane.xlu0 %774
        %776 = vadd.xlane.f32.xlu0 %v745
        %v777 = vpop.xlane.xlu0 %776
        %778 = vadd.xlane.f32.xlu0 %v747
        %v779 = vpop.xlane.xlu0 %778
        %v780 = vrcp.pop %v749
        %v781 = vrcp.pop %v751
        %v782 = vrcp.pop %v753
        %v783 = vrcp.pop %v755
        %v784 = vrcp.pop %v757
        %v785 = vrcp.pop %v759
        %v786 = vrcp.pop %v761
        %v787 = vrcp.pop %v763
        %v788 = vrcp.pop %v765
        %v789 = vrcp.pop %v767
        %v790 = vrcp.pop %v769
        %v791 = vrcp.pop %v771
        %v792 = vrcp.pop %v773
        %v793 = vrcp.pop %v775
        %v794 = vrcp.pop %v777
        %v795 = vrcp.pop %v779
        %v796 = vmul.f32 %v717, %v780
        %v797 = vmul.f32 %v719, %v781
        %v798 = vmul.f32 %v721, %v782
        %v799 = vmul.f32 %v723, %v783
        %v800 = vmul.f32 %v725, %v784
        %v801 = vmul.f32 %v727, %v785
        %v802 = vmul.f32 %v729, %v786
        %v803 = vmul.f32 %v731, %v787
        %v804 = vmul.f32 %v733, %v788
        %v805 = vmul.f32 %v735, %v789
        %v806 = vmul.f32 %v737, %v790
        %v807 = vmul.f32 %v739, %v791
        %v808 = vmul.f32 %v741, %v792
        %v809 = vmul.f32 %v743, %v793
        %v810 = vmul.f32 %v745, %v794
        %v811 = vmul.f32 %v747, %v795
        %v812 = vpack.c.bf16 %v797, %v796
        %v813 = vpack.c.bf16 %v799, %v798
        %v814 = vpack.c.bf16 %v801, %v800
        %v815 = vpack.c.bf16 %v803, %v802
        %v816 = vpack.c.bf16 %v805, %v804
        %v817 = vpack.c.bf16 %v807, %v806
        %v818 = vpack.c.bf16 %v809, %v808
        %v819 = vpack.c.bf16 %v811, %v810
        %820 = vmatprep.subr.bf16.mxu0 0
        %821 = vmatpush1.bf16.xpose.msra.mxu0 %v812
        %822 = vmatprep.subr.bf16.mxu0 0
        %823 = vmatpush1.bf16.xpose.msra.mxu0 %v813
        %824 = vmatprep.subr.bf16.mxu0 0
        %825 = vmatpush1.bf16.xpose.msra.mxu0 %v814
        %826 = vmatprep.subr.bf16.mxu0 0
        %827 = vmatpush1.bf16.xpose.msra.mxu0 %v815
        %828 = vmatprep.subr.bf16.mxu0 0
        %829 = vmatpush1.bf16.xpose.msra.mxu0 %v816
        %830 = vmatprep.subr.bf16.mxu0 0
        %831 = vmatpush1.bf16.xpose.msra.mxu0 %v817
        %832 = vmatprep.subr.bf16.mxu0 0
        %833 = vmatpush1.bf16.xpose.msra.mxu0 %v818
        %834 = vmatprep.subr.bf16.mxu0 0
        %835 = vmatpush1.bf16.xpose.msra.mxu0 %v819
        %836 = vmatprep.subr.bf16.mxu0 0
        %837 = vmatpush1.bf16.xpose.msra.mxu0 0
        %838 = vmatprep.subr.bf16.mxu0 0
        %839 = vmatpush1.bf16.xpose.msra.mxu0 0
        %840 = vmatprep.subr.bf16.mxu0 0
        %841 = vmatpush1.bf16.xpose.msra.mxu0 0
        %842 = vmatprep.subr.bf16.mxu0 0
        %843 = vmatpush1.bf16.xpose.msra.mxu0 0
        %844 = vmatprep.subr.bf16.mxu0 0
        %845 = vmatpush1.bf16.xpose.msra.mxu0 0
        %846 = vmatprep.subr.bf16.mxu0 0
        %847 = vmatpush1.bf16.xpose.msra.mxu0 0
        %848 = vmatprep.subr.bf16.mxu0 0
        %849 = vmatpush1.bf16.xpose.msra.mxu0 0
        %850 = vmatprep.subr.bf16.mxu0 0
        %851 = vmatpush1.bf16.xpose.msra.mxu0 0
        %852 = vmatprep.mubr.bf16.mxu0 0
        %853 = vmatmul.mubr.bf16.gmra.mrb[0].mxu0 %v519
        %v854 = vpop.f32.mrb[0].mxu0
        %v855 = vadd.f32 0.0, %v854
        %v856 = vpop.f32.mrb[0].mxu0
        %v857 = vpop.f32.mrb[0].mxu0
        %v858 = vpop.f32.mrb[0].mxu0
        %859 = vdwg.mxu0
        %860 = vst [vmem:[#allocation2] sm:$0xff] %v855
        %v861 = vld [vmem:[%s403 + $0x4] sm:$0xf]
        %v862 = vld [vmem:[%s341 + $0x4] sm:$0xf]
        %v864 = vrot.slane %v515, 4
        %866 = vxpose.xlu0.c.b16.start [1/8] %v864, 128
        %867 = vxpose.xlu0.c.b16.cont [2/8] 0, 128
        %868 = vxpose.xlu0.c.b16.cont [3/8] 0, 128
        %869 = vxpose.xlu0.c.b16.cont [4/8] 0, 128
        %870 = vxpose.xlu0.c.b16.cont [5/8] 0, 128
        %871 = vxpose.xlu0.c.b16.cont [6/8] 0, 128
        %872 = vxpose.xlu0.c.b16.cont [7/8] 0, 128
        %873 = vxpose.xlu0.c.b16.end [8/8] 0, 128
        %v874 = vpop.trf.xlu0
        %v875 = vpop.trf.xlu0
        %v876 = vpop.trf.xlu0
        %v877 = vpop.trf.xlu0
        %v878 = vpop.trf.xlu0
        %v879 = vpop.trf.xlu0
        %v880 = vpop.trf.xlu0
        %v881 = vpop.trf.xlu0
        %v883 = vsel %vm542, %v874, 0
        %v886 = vsel %vm542, %v875, 0
        %v889 = vsel %vm542, %v876, 0
        %v892 = vsel %vm542, %v877, 0
        %v895 = vsel %vm542, %v878, 0
        %v898 = vsel %vm542, %v879, 0
        %v901 = vsel %vm542, %v880, 0
        %v904 = vsel %vm542, %v881, 0
        %v907 = vsel %vm567, %v861, 0
        %909 = vmatprep.subr.bf16.mxu0 0
        %910 = vmatpush1.bf16.msra.mxu0 %v907
        %911 = vmatprep.subr.bf16.mxu0 0
        %912 = vmatpush1.bf16.msra.mxu0 0
        %913 = vmatprep.subr.bf16.mxu0 0
        %914 = vmatpush1.bf16.msra.mxu0 0
        %915 = vmatprep.subr.bf16.mxu0 0
        %916 = vmatpush1.bf16.msra.mxu0 0
        %917 = vmatprep.subr.bf16.mxu0 0
        %918 = vmatpush1.bf16.msra.mxu0 0
        %919 = vmatprep.subr.bf16.mxu0 0
        %920 = vmatpush1.bf16.msra.mxu0 0
        %921 = vmatprep.subr.bf16.mxu0 0
        %922 = vmatpush1.bf16.msra.mxu0 0
        %923 = vmatprep.subr.bf16.mxu0 0
        %924 = vmatpush1.bf16.msra.mxu0 0
        %925 = vmatprep.subr.bf16.mxu0 0
        %926 = vmatpush1.bf16.msra.mxu0 0
        %927 = vmatprep.subr.bf16.mxu0 0
        %928 = vmatpush1.bf16.msra.mxu0 0
        %929 = vmatprep.subr.bf16.mxu0 0
        %930 = vmatpush1.bf16.msra.mxu0 0
        %931 = vmatprep.subr.bf16.mxu0 0
        %932 = vmatpush1.bf16.msra.mxu0 0
        %933 = vmatprep.subr.bf16.mxu0 0
        %934 = vmatpush1.bf16.msra.mxu0 0
        %935 = vmatprep.subr.bf16.mxu0 0
        %936 = vmatpush1.bf16.msra.mxu0 0
        %937 = vmatprep.subr.bf16.mxu0 0
        %938 = vmatpush1.bf16.msra.mxu0 0
        %939 = vmatprep.subr.bf16.mxu0 0
        %940 = vmatpush1.bf16.msra.mxu0 0
        %941 = vmatprep.mubr.bf16.mxu0 0
        %942 = vmatmul.mubr.bf16.gmra.mrb[0].mxu0 %v883
        %v943 = vpop.f32.mrb[0].mxu0
        %v944 = vadd.f32 %v524, %v943
        %v945 = vpop.f32.mrb[0].mxu0
        %v946 = vpop.f32.mrb[0].mxu0
        %v947 = vadd.f32 %v524, %v946
        %v948 = vpop.f32.mrb[0].mxu0
        %949 = vmatprep.mubr.bf16.mxu0 0
        %950 = vmatmul.mubr.bf16.gmra.mrb[0].mxu0 %v886
        %v951 = vpop.f32.mrb[0].mxu0
        %v952 = vadd.f32 %v524, %v951
        %v953 = vpop.f32.mrb[0].mxu0
        %v954 = vpop.f32.mrb[0].mxu0
        %v955 = vadd.f32 %v524, %v954
        %v956 = vpop.f32.mrb[0].mxu0
        %957 = vmatprep.mubr.bf16.mxu0 0
        %958 = vmatmul.mubr.bf16.gmra.mrb[0].mxu0 %v889
        %v959 = vpop.f32.mrb[0].mxu0
        %v960 = vadd.f32 %v524, %v959
        %v961 = vpop.f32.mrb[0].mxu0
        %v962 = vpop.f32.mrb[0].mxu0
        %v963 = vadd.f32 %v524, %v962
        %v964 = vpop.f32.mrb[0].mxu0
        %965 = vmatprep.mubr.bf16.mxu0 0
        %966 = vmatmul.mubr.bf16.gmra.mrb[0].mxu0 %v892
        %v967 = vpop.f32.mrb[0].mxu0
        %v968 = vadd.f32 %v524, %v967
        %v969 = vpop.f32.mrb[0].mxu0
        %v970 = vpop.f32.mrb[0].mxu0
        %v971 = vadd.f32 %v524, %v970
        %v972 = vpop.f32.mrb[0].mxu0
        %973 = vmatprep.mubr.bf16.mxu0 0
        %974 = vmatmul.mubr.bf16.gmra.mrb[0].mxu0 %v895
        %v975 = vpop.f32.mrb[0].mxu0
        %v976 = vadd.f32 %v524, %v975
        %v977 = vpop.f32.mrb[0].mxu0
        %v978 = vpop.f32.mrb[0].mxu0
        %v979 = vadd.f32 %v524, %v978
        %v980 = vpop.f32.mrb[0].mxu0
        %981 = vmatprep.mubr.bf16.mxu0 0
        %982 = vmatmul.mubr.bf16.gmra.mrb[0].mxu0 %v898
        %v983 = vpop.f32.mrb[0].mxu0
        %v984 = vadd.f32 %v524, %v983
        %v985 = vpop.f32.mrb[0].mxu0
        %v986 = vpop.f32.mrb[0].mxu0
        %v987 = vadd.f32 %v524, %v986
        %v988 = vpop.f32.mrb[0].mxu0
        %989 = vmatprep.mubr.bf16.mxu0 0
        %990 = vmatmul.mubr.bf16.gmra.mrb[0].mxu0 %v901
        %v991 = vpop.f32.mrb[0].mxu0
        %v992 = vadd.f32 %v524, %v991
        %v993 = vpop.f32.mrb[0].mxu0
        %v994 = vpop.f32.mrb[0].mxu0
        %v995 = vadd.f32 %v524, %v994
        %v996 = vpop.f32.mrb[0].mxu0
        %997 = vmatprep.mubr.bf16.mxu0 0
        %998 = vmatmul.mubr.bf16.gmra.mrb[0].mxu0 %v904
        %v999 = vpop.f32.mrb[0].mxu0
        %v1000 = vadd.f32 %v524, %v999
        %v1001 = vpop.f32.mrb[0].mxu0
        %v1002 = vpop.f32.mrb[0].mxu0
        %v1003 = vadd.f32 %v524, %v1002
        %v1004 = vpop.f32.mrb[0].mxu0
        %1005 = vdwg.mxu0
        %1006 = vmax.xlane.f32.xlu0 %v944
        %v1007 = vpop.xlane.xlu0 %1006
        %1008 = vmax.xlane.f32.xlu0 %v947
        %v1009 = vpop.xlane.xlu0 %1008
        %1010 = vmax.xlane.f32.xlu0 %v952
        %v1011 = vpop.xlane.xlu0 %1010
        %1012 = vmax.xlane.f32.xlu0 %v955
        %v1013 = vpop.xlane.xlu0 %1012
        %1014 = vmax.xlane.f32.xlu0 %v960
        %v1015 = vpop.xlane.xlu0 %1014
        %1016 = vmax.xlane.f32.xlu0 %v963
        %v1017 = vpop.xlane.xlu0 %1016
        %1018 = vmax.xlane.f32.xlu0 %v968
        %v1019 = vpop.xlane.xlu0 %1018
        %1020 = vmax.xlane.f32.xlu0 %v971
        %v1021 = vpop.xlane.xlu0 %1020
        %1022 = vmax.xlane.f32.xlu0 %v976
        %v1023 = vpop.xlane.xlu0 %1022
        %1024 = vmax.xlane.f32.xlu0 %v979
        %v1025 = vpop.xlane.xlu0 %1024
        %1026 = vmax.xlane.f32.xlu0 %v984
        %v1027 = vpop.xlane.xlu0 %1026
        %1028 = vmax.xlane.f32.xlu0 %v987
        %v1029 = vpop.xlane.xlu0 %1028
        %1030 = vmax.xlane.f32.xlu0 %v992
        %v1031 = vpop.xlane.xlu0 %1030
        %1032 = vmax.xlane.f32.xlu0 %v995
        %v1033 = vpop.xlane.xlu0 %1032
        %1034 = vmax.xlane.f32.xlu0 %v1000
        %v1035 = vpop.xlane.xlu0 %1034
        %1036 = vmax.xlane.f32.xlu0 %v1003
        %v1037 = vpop.xlane.xlu0 %1036
        %v1038 = vsub.f32 %v944, %v1007
        %v1039 = vsub.f32 %v947, %v1009
        %v1040 = vsub.f32 %v952, %v1011
        %v1041 = vsub.f32 %v955, %v1013
        %v1042 = vsub.f32 %v960, %v1015
        %v1043 = vsub.f32 %v963, %v1017
        %v1044 = vsub.f32 %v968, %v1019
        %v1045 = vsub.f32 %v971, %v1021
        %v1046 = vsub.f32 %v976, %v1023
        %v1047 = vsub.f32 %v979, %v1025
        %v1048 = vsub.f32 %v984, %v1027
        %v1049 = vsub.f32 %v987, %v1029
        %v1050 = vsub.f32 %v992, %v1031
        %v1051 = vsub.f32 %v995, %v1033
        %v1052 = vsub.f32 %v1000, %v1035
        %v1053 = vsub.f32 %v1003, %v1037
        %v1054 = vmul.f32 %v1038, 1.442695
        %v1055 = vpow.pop %v1054
        %v1056 = vmul.f32 %v1039, 1.442695
        %v1057 = vpow.pop %v1056
        %v1058 = vmul.f32 %v1040, 1.442695
        %v1059 = vpow.pop %v1058
        %v1060 = vmul.f32 %v1041, 1.442695
        %v1061 = vpow.pop %v1060
        %v1062 = vmul.f32 %v1042, 1.442695
        %v1063 = vpow.pop %v1062
        %v1064 = vmul.f32 %v1043, 1.442695
        %v1065 = vpow.pop %v1064
        %v1066 = vmul.f32 %v1044, 1.442695
        %v1067 = vpow.pop %v1066
        %v1068 = vmul.f32 %v1045, 1.442695
        %v1069 = vpow.pop %v1068
        %v1070 = vmul.f32 %v1046, 1.442695
        %v1071 = vpow.pop %v1070
        %v1072 = vmul.f32 %v1047, 1.442695
        %v1073 = vpow.pop %v1072
        %v1074 = vmul.f32 %v1048, 1.442695
        %v1075 = vpow.pop %v1074
        %v1076 = vmul.f32 %v1049, 1.442695
        %v1077 = vpow.pop %v1076
        %v1078 = vmul.f32 %v1050, 1.442695
        %v1079 = vpow.pop %v1078
        %v1080 = vmul.f32 %v1051, 1.442695
        %v1081 = vpow.pop %v1080
        %v1082 = vmul.f32 %v1052, 1.442695
        %v1083 = vpow.pop %v1082
        %v1084 = vmul.f32 %v1053, 1.442695
        %v1085 = vpow.pop %v1084
        %1086 = vadd.xlane.f32.xlu0 %v1055
        %v1087 = vpop.xlane.xlu0 %1086
        %1088 = vadd.xlane.f32.xlu0 %v1057
        %v1089 = vpop.xlane.xlu0 %1088
        %1090 = vadd.xlane.f32.xlu0 %v1059
        %v1091 = vpop.xlane.xlu0 %1090
        %1092 = vadd.xlane.f32.xlu0 %v1061
        %v1093 = vpop.xlane.xlu0 %1092
        %1094 = vadd.xlane.f32.xlu0 %v1063
        %v1095 = vpop.xlane.xlu0 %1094
        %1096 = vadd.xlane.f32.xlu0 %v1065
        %v1097 = vpop.xlane.xlu0 %1096
        %1098 = vadd.xlane.f32.xlu0 %v1067
        %v1099 = vpop.xlane.xlu0 %1098
        %1100 = vadd.xlane.f32.xlu0 %v1069
        %v1101 = vpop.xlane.xlu0 %1100
        %1102 = vadd.xlane.f32.xlu0 %v1071
        %v1103 = vpop.xlane.xlu0 %1102
        %1104 = vadd.xlane.f32.xlu0 %v1073
        %v1105 = vpop.xlane.xlu0 %1104
        %1106 = vadd.xlane.f32.xlu0 %v1075
        %v1107 = vpop.xlane.xlu0 %1106
        %1108 = vadd.xlane.f32.xlu0 %v1077
        %v1109 = vpop.xlane.xlu0 %1108
        %1110 = vadd.xlane.f32.xlu0 %v1079
        %v1111 = vpop.xlane.xlu0 %1110
        %1112 = vadd.xlane.f32.xlu0 %v1081
        %v1113 = vpop.xlane.xlu0 %1112
        %1114 = vadd.xlane.f32.xlu0 %v1083
        %v1115 = vpop.xlane.xlu0 %1114
        %1116 = vadd.xlane.f32.xlu0 %v1085
        %v1117 = vpop.xlane.xlu0 %1116
        %v1118 = vrcp.pop %v1087
        %v1119 = vrcp.pop %v1089
        %v1120 = vrcp.pop %v1091
        %v1121 = vrcp.pop %v1093
        %v1122 = vrcp.pop %v1095
        %v1123 = vrcp.pop %v1097
        %v1124 = vrcp.pop %v1099
        %v1125 = vrcp.pop %v1101
        %v1126 = vrcp.pop %v1103
        %v1127 = vrcp.pop %v1105
        %v1128 = vrcp.pop %v1107
        %v1129 = vrcp.pop %v1109
        %v1130 = vrcp.pop %v1111
        %v1131 = vrcp.pop %v1113
        %v1132 = vrcp.pop %v1115
        %v1133 = vrcp.pop %v1117
        %v1134 = vmul.f32 %v1055, %v1118
        %v1135 = vmul.f32 %v1057, %v1119
        %v1136 = vmul.f32 %v1059, %v1120
        %v1137 = vmul.f32 %v1061, %v1121
        %v1138 = vmul.f32 %v1063, %v1122
        %v1139 = vmul.f32 %v1065, %v1123
        %v1140 = vmul.f32 %v1067, %v1124
        %v1141 = vmul.f32 %v1069, %v1125
        %v1142 = vmul.f32 %v1071, %v1126
        %v1143 = vmul.f32 %v1073, %v1127
        %v1144 = vmul.f32 %v1075, %v1128
        %v1145 = vmul.f32 %v1077, %v1129
        %v1146 = vmul.f32 %v1079, %v1130
        %v1147 = vmul.f32 %v1081, %v1131
        %v1148 = vmul.f32 %v1083, %v1132
        %v1149 = vmul.f32 %v1085, %v1133
        %v1150 = vpack.c.bf16 %v1135, %v1134
        %v1151 = vpack.c.bf16 %v1137, %v1136
        %v1152 = vpack.c.bf16 %v1139, %v1138
        %v1153 = vpack.c.bf16 %v1141, %v1140
        %v1154 = vpack.c.bf16 %v1143, %v1142
        %v1155 = vpack.c.bf16 %v1145, %v1144
        %v1156 = vpack.c.bf16 %v1147, %v1146
        %v1157 = vpack.c.bf16 %v1149, %v1148
        %1158 = vmatprep.subr.bf16.mxu0 0
        %1159 = vmatpush1.bf16.xpose.msra.mxu0 %v1150
        %1160 = vmatprep.subr.bf16.mxu0 0
        %1161 = vmatpush1.bf16.xpose.msra.mxu0 %v1151
        %1162 = vmatprep.subr.bf16.mxu0 0
        %1163 = vmatpush1.bf16.xpose.msra.mxu0 %v1152
        %1164 = vmatprep.subr.bf16.mxu0 0
        %1165 = vmatpush1.bf16.xpose.msra.mxu0 %v1153
        %1166 = vmatprep.subr.bf16.mxu0 0
        %1167 = vmatpush1.bf16.xpose.msra.mxu0 %v1154
        %1168 = vmatprep.subr.bf16.mxu0 0
        %1169 = vmatpush1.bf16.xpose.msra.mxu0 %v1155
        %1170 = vmatprep.subr.bf16.mxu0 0
        %1171 = vmatpush1.bf16.xpose.msra.mxu0 %v1156
        %1172 = vmatprep.subr.bf16.mxu0 0
        %1173 = vmatpush1.bf16.xpose.msra.mxu0 %v1157
        %1174 = vmatprep.subr.bf16.mxu0 0
        %1175 = vmatpush1.bf16.xpose.msra.mxu0 0
        %1176 = vmatprep.subr.bf16.mxu0 0
        %1177 = vmatpush1.bf16.xpose.msra.mxu0 0
        %1178 = vmatprep.subr.bf16.mxu0 0
        %1179 = vmatpush1.bf16.xpose.msra.mxu0 0
        %1180 = vmatprep.subr.bf16.mxu0 0
        %1181 = vmatpush1.bf16.xpose.msra.mxu0 0
        %1182 = vmatprep.subr.bf16.mxu0 0
        %1183 = vmatpush1.bf16.xpose.msra.mxu0 0
        %1184 = vmatprep.subr.bf16.mxu0 0
        %1185 = vmatpush1.bf16.xpose.msra.mxu0 0
        %1186 = vmatprep.subr.bf16.mxu0 0
        %1187 = vmatpush1.bf16.xpose.msra.mxu0 0
        %1188 = vmatprep.subr.bf16.mxu0 0
        %1189 = vmatpush1.bf16.xpose.msra.mxu0 0
        %1190 = vmatprep.mubr.bf16.mxu0 0
        %1191 = vmatmul.mubr.bf16.gmra.mrb[0].mxu0 %v862
        %v1192 = vpop.f32.mrb[0].mxu0
        %v1193 = vadd.f32 0.0, %v1192
        %v1194 = vpop.f32.mrb[0].mxu0
        %v1195 = vpop.f32.mrb[0].mxu0
        %v1196 = vpop.f32.mrb[0].mxu0
        %1197 = vdwg.mxu0
        %1198 = vst [vmem:[#allocation2 + $0x8] sm:$0xff] %v1193
        %v1199 = vld [vmem:[%s403 + $0x8] sm:$0xf]
        %v1200 = vld [vmem:[%s341 + $0x8] sm:$0xf]
        %1201 = vxpose.xlu0.c.b16.start [1/8] %v516, 128
        %1202 = vxpose.xlu0.c.b16.cont [2/8] 0, 128
        %1203 = vxpose.xlu0.c.b16.cont [3/8] 0, 128
        %1204 = vxpose.xlu0.c.b16.cont [4/8] 0, 128
        %1205 = vxpose.xlu0.c.b16.cont [5/8] 0, 128
        %1206 = vxpose.xlu0.c.b16.cont [6/8] 0, 128
        %1207 = vxpose.xlu0.c.b16.cont [7/8] 0, 128
        %1208 = vxpose.xlu0.c.b16.end [8/8] 0, 128
        %v1209 = vpop.trf.xlu0
        %v1210 = vpop.trf.xlu0
        %v1211 = vpop.trf.xlu0
        %v1212 = vpop.trf.xlu0
        %v1213 = vpop.trf.xlu0
        %v1214 = vpop.trf.xlu0
        %v1215 = vpop.trf.xlu0
        %v1216 = vpop.trf.xlu0
        %v1218 = vsel %vm542, %v1209, 0
        %v1221 = vsel %vm542, %v1210, 0
        %v1224 = vsel %vm542, %v1211, 0
        %v1227 = vsel %vm542, %v1212, 0
        %v1230 = vsel %vm542, %v1213, 0
        %v1233 = vsel %vm542, %v1214, 0
        %v1236 = vsel %vm542, %v1215, 0
        %v1239 = vsel %vm542, %v1216, 0
        %v1242 = vsel %vm567, %v1199, 0
        %1244 = vmatprep.subr.bf16.mxu0 0
        %1245 = vmatpush1.bf16.msra.mxu0 %v1242
        %1246 = vmatprep.subr.bf16.mxu0 0
        %1247 = vmatpush1.bf16.msra.mxu0 0
        %1248 = vmatprep.subr.bf16.mxu0 0
        %1249 = vmatpush1.bf16.msra.mxu0 0
        %1250 = vmatprep.subr.bf16.mxu0 0
        %1251 = vmatpush1.bf16.msra.mxu0 0
        %1252 = vmatprep.subr.bf16.mxu0 0
        %1253 = vmatpush1.bf16.msra.mxu0 0
        %1254 = vmatprep.subr.bf16.mxu0 0
        %1255 = vmatpush1.bf16.msra.mxu0 0
        %1256 = vmatprep.subr.bf16.mxu0 0
        %1257 = vmatpush1.bf16.msra.mxu0 0
        %1258 = vmatprep.subr.bf16.mxu0 0
        %1259 = vmatpush1.bf16.msra.mxu0 0
        %1260 = vmatprep.subr.bf16.mxu0 0
        %1261 = vmatpush1.bf16.msra.mxu0 0
        %1262 = vmatprep.subr.bf16.mxu0 0
        %1263 = vmatpush1.bf16.msra.mxu0 0
        %1264 = vmatprep.subr.bf16.mxu0 0
        %1265 = vmatpush1.bf16.msra.mxu0 0
        %1266 = vmatprep.subr.bf16.mxu0 0
        %1267 = vmatpush1.bf16.msra.mxu0 0
        %1268 = vmatprep.subr.bf16.mxu0 0
        %1269 = vmatpush1.bf16.msra.mxu0 0
        %1270 = vmatprep.subr.bf16.mxu0 0
        %1271 = vmatpush1.bf16.msra.mxu0 0
        %1272 = vmatprep.subr.bf16.mxu0 0
        %1273 = vmatpush1.bf16.msra.mxu0 0
        %1274 = vmatprep.subr.bf16.mxu0 0
        %1275 = vmatpush1.bf16.msra.mxu0 0
        %1276 = vmatprep.mubr.bf16.mxu0 0
        %1277 = vmatmul.mubr.bf16.gmra.mrb[0].mxu0 %v1218
        %v1278 = vpop.f32.mrb[0].mxu0
        %v1279 = vadd.f32 %v524, %v1278
        %v1280 = vpop.f32.mrb[0].mxu0
        %v1281 = vpop.f32.mrb[0].mxu0
        %v1282 = vadd.f32 %v524, %v1281
        %v1283 = vpop.f32.mrb[0].mxu0
        %1284 = vmatprep.mubr.bf16.mxu0 0
        %1285 = vmatmul.mubr.bf16.gmra.mrb[0].mxu0 %v1221
        %v1286 = vpop.f32.mrb[0].mxu0
        %v1287 = vadd.f32 %v524, %v1286
        %v1288 = vpop.f32.mrb[0].mxu0
        %v1289 = vpop.f32.mrb[0].mxu0
        %v1290 = vadd.f32 %v524, %v1289
        %v1291 = vpop.f32.mrb[0].mxu0
        %1292 = vmatprep.mubr.bf16.mxu0 0
        %1293 = vmatmul.mubr.bf16.gmra.mrb[0].mxu0 %v1224
        %v1294 = vpop.f32.mrb[0].mxu0
        %v1295 = vadd.f32 %v524, %v1294
        %v1296 = vpop.f32.mrb[0].mxu0
        %v1297 = vpop.f32.mrb[0].mxu0
        %v1298 = vadd.f32 %v524, %v1297
        %v1299 = vpop.f32.mrb[0].mxu0
        %1300 = vmatprep.mubr.bf16.mxu0 0
        %1301 = vmatmul.mubr.bf16.gmra.mrb[0].mxu0 %v1227
        %v1302 = vpop.f32.mrb[0].mxu0
        %v1303 = vadd.f32 %v524, %v1302
        %v1304 = vpop.f32.mrb[0].mxu0
        %v1305 = vpop.f32.mrb[0].mxu0
        %v1306 = vadd.f32 %v524, %v1305
        %v1307 = vpop.f32.mrb[0].mxu0
        %1308 = vmatprep.mubr.bf16.mxu0 0
        %1309 = vmatmul.mubr.bf16.gmra.mrb[0].mxu0 %v1230
        %v1310 = vpop.f32.mrb[0].mxu0
        %v1311 = vadd.f32 %v524, %v1310
        %v1312 = vpop.f32.mrb[0].mxu0
        %v1313 = vpop.f32.mrb[0].mxu0
        %v1314 = vadd.f32 %v524, %v1313
        %v1315 = vpop.f32.mrb[0].mxu0
        %1316 = vmatprep.mubr.bf16.mxu0 0
        %1317 = vmatmul.mubr.bf16.gmra.mrb[0].mxu0 %v1233
        %v1318 = vpop.f32.mrb[0].mxu0
        %v1319 = vadd.f32 %v524, %v1318
        %v1320 = vpop.f32.mrb[0].mxu0
        %v1321 = vpop.f32.mrb[0].mxu0
        %v1322 = vadd.f32 %v524, %v1321
        %v1323 = vpop.f32.mrb[0].mxu0
        %1324 = vmatprep.mubr.bf16.mxu0 0
        %1325 = vmatmul.mubr.bf16.gmra.mrb[0].mxu0 %v1236
        %v1326 = vpop.f32.mrb[0].mxu0
        %v1327 = vadd.f32 %v524, %v1326
        %v1328 = vpop.f32.mrb[0].mxu0
        %v1329 = vpop.f32.mrb[0].mxu0
        %v1330 = vadd.f32 %v524, %v1329
        %v1331 = vpop.f32.mrb[0].mxu0
        %1332 = vmatprep.mubr.bf16.mxu0 0
        %1333 = vmatmul.mubr.bf16.gmra.mrb[0].mxu0 %v1239
        %v1334 = vpop.f32.mrb[0].mxu0
        %v1335 = vadd.f32 %v524, %v1334
        %v1336 = vpop.f32.mrb[0].mxu0
        %v1337 = vpop.f32.mrb[0].mxu0
        %v1338 = vadd.f32 %v524, %v1337
        %v1339 = vpop.f32.mrb[0].mxu0
        %1340 = vdwg.mxu0
        %1341 = vmax.xlane.f32.xlu0 %v1279
        %v1342 = vpop.xlane.xlu0 %1341
        %1343 = vmax.xlane.f32.xlu0 %v1282
        %v1344 = vpop.xlane.xlu0 %1343
        %1345 = vmax.xlane.f32.xlu0 %v1287
        %v1346 = vpop.xlane.xlu0 %1345
        %1347 = vmax.xlane.f32.xlu0 %v1290
        %v1348 = vpop.xlane.xlu0 %1347
        %1349 = vmax.xlane.f32.xlu0 %v1295
        %v1350 = vpop.xlane.xlu0 %1349
        %1351 = vmax.xlane.f32.xlu0 %v1298
        %v1352 = vpop.xlane.xlu0 %1351
        %1353 = vmax.xlane.f32.xlu0 %v1303
        %v1354 = vpop.xlane.xlu0 %1353
        %1355 = vmax.xlane.f32.xlu0 %v1306
        %v1356 = vpop.xlane.xlu0 %1355
        %1357 = vmax.xlane.f32.xlu0 %v1311
        %v1358 = vpop.xlane.xlu0 %1357
        %1359 = vmax.xlane.f32.xlu0 %v1314
        %v1360 = vpop.xlane.xlu0 %1359
        %1361 = vmax.xlane.f32.xlu0 %v1319
        %v1362 = vpop.xlane.xlu0 %1361
        %1363 = vmax.xlane.f32.xlu0 %v1322
        %v1364 = vpop.xlane.xlu0 %1363
        %1365 = vmax.xlane.f32.xlu0 %v1327
        %v1366 = vpop.xlane.xlu0 %1365
        %1367 = vmax.xlane.f32.xlu0 %v1330
        %v1368 = vpop.xlane.xlu0 %1367
        %1369 = vmax.xlane.f32.xlu0 %v1335
        %v1370 = vpop.xlane.xlu0 %1369
        %1371 = vmax.xlane.f32.xlu0 %v1338
        %v1372 = vpop.xlane.xlu0 %1371
        %v1373 = vsub.f32 %v1279, %v1342
        %v1374 = vsub.f32 %v1282, %v1344
        %v1375 = vsub.f32 %v1287, %v1346
        %v1376 = vsub.f32 %v1290, %v1348
        %v1377 = vsub.f32 %v1295, %v1350
        %v1378 = vsub.f32 %v1298, %v1352
        %v1379 = vsub.f32 %v1303, %v1354
        %v1380 = vsub.f32 %v1306, %v1356
        %v1381 = vsub.f32 %v1311, %v1358
        %v1382 = vsub.f32 %v1314, %v1360
        %v1383 = vsub.f32 %v1319, %v1362
        %v1384 = vsub.f32 %v1322, %v1364
        %v1385 = vsub.f32 %v1327, %v1366
        %v1386 = vsub.f32 %v1330, %v1368
        %v1387 = vsub.f32 %v1335, %v1370
        %v1388 = vsub.f32 %v1338, %v1372
        %v1389 = vmul.f32 %v1373, 1.442695
        %v1390 = vpow.pop %v1389
        %v1391 = vmul.f32 %v1374, 1.442695
        %v1392 = vpow.pop %v1391
        %v1393 = vmul.f32 %v1375, 1.442695
        %v1394 = vpow.pop %v1393
        %v1395 = vmul.f32 %v1376, 1.442695
        %v1396 = vpow.pop %v1395
        %v1397 = vmul.f32 %v1377, 1.442695
        %v1398 = vpow.pop %v1397
        %v1399 = vmul.f32 %v1378, 1.442695
        %v1400 = vpow.pop %v1399
        %v1401 = vmul.f32 %v1379, 1.442695
        %v1402 = vpow.pop %v1401
        %v1403 = vmul.f32 %v1380, 1.442695
        %v1404 = vpow.pop %v1403
        %v1405 = vmul.f32 %v1381, 1.442695
        %v1406 = vpow.pop %v1405
        %v1407 = vmul.f32 %v1382, 1.442695
        %v1408 = vpow.pop %v1407
        %v1409 = vmul.f32 %v1383, 1.442695
        %v1410 = vpow.pop %v1409
        %v1411 = vmul.f32 %v1384, 1.442695
        %v1412 = vpow.pop %v1411
        %v1413 = vmul.f32 %v1385, 1.442695
        %v1414 = vpow.pop %v1413
        %v1415 = vmul.f32 %v1386, 1.442695
        %v1416 = vpow.pop %v1415
        %v1417 = vmul.f32 %v1387, 1.442695
        %v1418 = vpow.pop %v1417
        %v1419 = vmul.f32 %v1388, 1.442695
        %v1420 = vpow.pop %v1419
        %1421 = vadd.xlane.f32.xlu0 %v1390
        %v1422 = vpop.xlane.xlu0 %1421
        %1423 = vadd.xlane.f32.xlu0 %v1392
        %v1424 = vpop.xlane.xlu0 %1423
        %1425 = vadd.xlane.f32.xlu0 %v1394
        %v1426 = vpop.xlane.xlu0 %1425
        %1427 = vadd.xlane.f32.xlu0 %v1396
        %v1428 = vpop.xlane.xlu0 %1427
        %1429 = vadd.xlane.f32.xlu0 %v1398
        %v1430 = vpop.xlane.xlu0 %1429
        %1431 = vadd.xlane.f32.xlu0 %v1400
        %v1432 = vpop.xlane.xlu0 %1431
        %1433 = vadd.xlane.f32.xlu0 %v1402
        %v1434 = vpop.xlane.xlu0 %1433
        %1435 = vadd.xlane.f32.xlu0 %v1404
        %v1436 = vpop.xlane.xlu0 %1435
        %1437 = vadd.xlane.f32.xlu0 %v1406
        %v1438 = vpop.xlane.xlu0 %1437
        %1439 = vadd.xlane.f32.xlu0 %v1408
        %v1440 = vpop.xlane.xlu0 %1439
        %1441 = vadd.xlane.f32.xlu0 %v1410
        %v1442 = vpop.xlane.xlu0 %1441
        %1443 = vadd.xlane.f32.xlu0 %v1412
        %v1444 = vpop.xlane.xlu0 %1443
        %1445 = vadd.xlane.f32.xlu0 %v1414
        %v1446 = vpop.xlane.xlu0 %1445
        %1447 = vadd.xlane.f32.xlu0 %v1416
        %v1448 = vpop.xlane.xlu0 %1447
        %1449 = vadd.xlane.f32.xlu0 %v1418
        %v1450 = vpop.xlane.xlu0 %1449
        %1451 = vadd.xlane.f32.xlu0 %v1420
        %v1452 = vpop.xlane.xlu0 %1451
        %v1453 = vrcp.pop %v1422
        %v1454 = vrcp.pop %v1424
        %v1455 = vrcp.pop %v1426
        %v1456 = vrcp.pop %v1428
        %v1457 = vrcp.pop %v1430
        %v1458 = vrcp.pop %v1432
        %v1459 = vrcp.pop %v1434
        %v1460 = vrcp.pop %v1436
        %v1461 = vrcp.pop %v1438
        %v1462 = vrcp.pop %v1440
        %v1463 = vrcp.pop %v1442
        %v1464 = vrcp.pop %v1444
        %v1465 = vrcp.pop %v1446
        %v1466 = vrcp.pop %v1448
        %v1467 = vrcp.pop %v1450
        %v1468 = vrcp.pop %v1452
        %v1469 = vmul.f32 %v1390, %v1453
        %v1470 = vmul.f32 %v1392, %v1454
        %v1471 = vmul.f32 %v1394, %v1455
        %v1472 = vmul.f32 %v1396, %v1456
        %v1473 = vmul.f32 %v1398, %v1457
        %v1474 = vmul.f32 %v1400, %v1458
        %v1475 = vmul.f32 %v1402, %v1459
        %v1476 = vmul.f32 %v1404, %v1460
        %v1477 = vmul.f32 %v1406, %v1461
        %v1478 = vmul.f32 %v1408, %v1462
        %v1479 = vmul.f32 %v1410, %v1463
        %v1480 = vmul.f32 %v1412, %v1464
        %v1481 = vmul.f32 %v1414, %v1465
        %v1482 = vmul.f32 %v1416, %v1466
        %v1483 = vmul.f32 %v1418, %v1467
        %v1484 = vmul.f32 %v1420, %v1468
        %v1485 = vpack.c.bf16 %v1470, %v1469
        %v1486 = vpack.c.bf16 %v1472, %v1471
        %v1487 = vpack.c.bf16 %v1474, %v1473
        %v1488 = vpack.c.bf16 %v1476, %v1475
        %v1489 = vpack.c.bf16 %v1478, %v1477
        %v1490 = vpack.c.bf16 %v1480, %v1479
        %v1491 = vpack.c.bf16 %v1482, %v1481
        %v1492 = vpack.c.bf16 %v1484, %v1483
        %1493 = vmatprep.subr.bf16.mxu0 0
        %1494 = vmatpush1.bf16.xpose.msra.mxu0 %v1485
        %1495 = vmatprep.subr.bf16.mxu0 0
        %1496 = vmatpush1.bf16.xpose.msra.mxu0 %v1486
        %1497 = vmatprep.subr.bf16.mxu0 0
        %1498 = vmatpush1.bf16.xpose.msra.mxu0 %v1487
        %1499 = vmatprep.subr.bf16.mxu0 0
        %1500 = vmatpush1.bf16.xpose.msra.mxu0 %v1488
        %1501 = vmatprep.subr.bf16.mxu0 0
        %1502 = vmatpush1.bf16.xpose.msra.mxu0 %v1489
        %1503 = vmatprep.subr.bf16.mxu0 0
        %1504 = vmatpush1.bf16.xpose.msra.mxu0 %v1490
        %1505 = vmatprep.subr.bf16.mxu0 0
        %1506 = vmatpush1.bf16.xpose.msra.mxu0 %v1491
        %1507 = vmatprep.subr.bf16.mxu0 0
        %1508 = vmatpush1.bf16.xpose.msra.mxu0 %v1492
        %1509 = vmatprep.subr.bf16.mxu0 0
        %1510 = vmatpush1.bf16.xpose.msra.mxu0 0
        %1511 = vmatprep.subr.bf16.mxu0 0
        %1512 = vmatpush1.bf16.xpose.msra.mxu0 0
        %1513 = vmatprep.subr.bf16.mxu0 0
        %1514 = vmatpush1.bf16.xpose.msra.mxu0 0
        %1515 = vmatprep.subr.bf16.mxu0 0
        %1516 = vmatpush1.bf16.xpose.msra.mxu0 0
        %1517 = vmatprep.subr.bf16.mxu0 0
        %1518 = vmatpush1.bf16.xpose.msra.mxu0 0
        %1519 = vmatprep.subr.bf16.mxu0 0
        %1520 = vmatpush1.bf16.xpose.msra.mxu0 0
        %1521 = vmatprep.subr.bf16.mxu0 0
        %1522 = vmatpush1.bf16.xpose.msra.mxu0 0
        %1523 = vmatprep.subr.bf16.mxu0 0
        %1524 = vmatpush1.bf16.xpose.msra.mxu0 0
        %1525 = vmatprep.mubr.bf16.mxu0 0
        %1526 = vmatmul.mubr.bf16.gmra.mrb[0].mxu0 %v1200
        %v1527 = vpop.f32.mrb[0].mxu0
        %v1528 = vadd.f32 0.0, %v1527
        %v1529 = vpop.f32.mrb[0].mxu0
        %v1530 = vpop.f32.mrb[0].mxu0
        %v1531 = vpop.f32.mrb[0].mxu0
        %1532 = vdwg.mxu0
        %1533 = vst [vmem:[#allocation2 + $0x10] sm:$0xff] %v1528
        %v1534 = vld [vmem:[%s403 + $0xc] sm:$0xf]
        %v1535 = vld [vmem:[%s341 + $0xc] sm:$0xf]
        %v1537 = vrot.slane %v516, 4
        %1539 = vxpose.xlu0.c.b16.start [1/8] %v1537, 128
        %1540 = vxpose.xlu0.c.b16.cont [2/8] 0, 128
        %1541 = vxpose.xlu0.c.b16.cont [3/8] 0, 128
        %1542 = vxpose.xlu0.c.b16.cont [4/8] 0, 128
        %1543 = vxpose.xlu0.c.b16.cont [5/8] 0, 128
        %1544 = vxpose.xlu0.c.b16.cont [6/8] 0, 128
        %1545 = vxpose.xlu0.c.b16.cont [7/8] 0, 128
        %1546 = vxpose.xlu0.c.b16.end [8/8] 0, 128
        %v1547 = vpop.trf.xlu0
        %v1548 = vpop.trf.xlu0
        %v1549 = vpop.trf.xlu0
        %v1550 = vpop.trf.xlu0
        %v1551 = vpop.trf.xlu0
        %v1552 = vpop.trf.xlu0
        %v1553 = vpop.trf.xlu0
        %v1554 = vpop.trf.xlu0
        %v1556 = vsel %vm542, %v1547, 0
        %v1559 = vsel %vm542, %v1548, 0
        %v1562 = vsel %vm542, %v1549, 0
        %v1565 = vsel %vm542, %v1550, 0
        %v1568 = vsel %vm542, %v1551, 0
        %v1571 = vsel %vm542, %v1552, 0
        %v1574 = vsel %vm542, %v1553, 0
        %v1577 = vsel %vm542, %v1554, 0
        %v1580 = vsel %vm567, %v1534, 0
        %1582 = vmatprep.subr.bf16.mxu0 0
        %1583 = vmatpush1.bf16.msra.mxu0 %v1580
        %1584 = vmatprep.subr.bf16.mxu0 0
        %1585 = vmatpush1.bf16.msra.mxu0 0
        %1586 = vmatprep.subr.bf16.mxu0 0
        %1587 = vmatpush1.bf16.msra.mxu0 0
        %1588 = vmatprep.subr.bf16.mxu0 0
        %1589 = vmatpush1.bf16.msra.mxu0 0
        %1590 = vmatprep.subr.bf16.mxu0 0
        %1591 = vmatpush1.bf16.msra.mxu0 0
        %1592 = vmatprep.subr.bf16.mxu0 0
        %1593 = vmatpush1.bf16.msra.mxu0 0
        %1594 = vmatprep.subr.bf16.mxu0 0
        %1595 = vmatpush1.bf16.msra.mxu0 0
        %1596 = vmatprep.subr.bf16.mxu0 0
        %1597 = vmatpush1.bf16.msra.mxu0 0
        %1598 = vmatprep.subr.bf16.mxu0 0
        %1599 = vmatpush1.bf16.msra.mxu0 0
        %1600 = vmatprep.subr.bf16.mxu0 0
        %1601 = vmatpush1.bf16.msra.mxu0 0
        %1602 = vmatprep.subr.bf16.mxu0 0
        %1603 = vmatpush1.bf16.msra.mxu0 0
        %1604 = vmatprep.subr.bf16.mxu0 0
        %1605 = vmatpush1.bf16.msra.mxu0 0
        %1606 = vmatprep.subr.bf16.mxu0 0
        %1607 = vmatpush1.bf16.msra.mxu0 0
        %1608 = vmatprep.subr.bf16.mxu0 0
        %1609 = vmatpush1.bf16.msra.mxu0 0
        %1610 = vmatprep.subr.bf16.mxu0 0
        %1611 = vmatpush1.bf16.msra.mxu0 0
        %1612 = vmatprep.subr.bf16.mxu0 0
        %1613 = vmatpush1.bf16.msra.mxu0 0
        %1614 = vmatprep.mubr.bf16.mxu0 0
        %1615 = vmatmul.mubr.bf16.gmra.mrb[0].mxu0 %v1556
        %v1616 = vpop.f32.mrb[0].mxu0
        %v1617 = vadd.f32 %v524, %v1616
        %v1618 = vpop.f32.mrb[0].mxu0
        %v1619 = vpop.f32.mrb[0].mxu0
        %v1620 = vadd.f32 %v524, %v1619
        %v1621 = vpop.f32.mrb[0].mxu0
        %1622 = vmatprep.mubr.bf16.mxu0 0
        %1623 = vmatmul.mubr.bf16.gmra.mrb[0].mxu0 %v1559
        %v1624 = vpop.f32.mrb[0].mxu0
        %v1625 = vadd.f32 %v524, %v1624
        %v1626 = vpop.f32.mrb[0].mxu0
        %v1627 = vpop.f32.mrb[0].mxu0
        %v1628 = vadd.f32 %v524, %v1627
        %v1629 = vpop.f32.mrb[0].mxu0
        %1630 = vmatprep.mubr.bf16.mxu0 0
        %1631 = vmatmul.mubr.bf16.gmra.mrb[0].mxu0 %v1562
        %v1632 = vpop.f32.mrb[0].mxu0
        %v1633 = vadd.f32 %v524, %v1632
        %v1634 = vpop.f32.mrb[0].mxu0
        %v1635 = vpop.f32.mrb[0].mxu0
        %v1636 = vadd.f32 %v524, %v1635
        %v1637 = vpop.f32.mrb[0].mxu0
        %1638 = vmatprep.mubr.bf16.mxu0 0
        %1639 = vmatmul.mubr.bf16.gmra.mrb[0].mxu0 %v1565
        %v1640 = vpop.f32.mrb[0].mxu0
        %v1641 = vadd.f32 %v524, %v1640
        %v1642 = vpop.f32.mrb[0].mxu0
        %v1643 = vpop.f32.mrb[0].mxu0
        %v1644 = vadd.f32 %v524, %v1643
        %v1645 = vpop.f32.mrb[0].mxu0
        %1646 = vmatprep.mubr.bf16.mxu0 0
        %1647 = vmatmul.mubr.bf16.gmra.mrb[0].mxu0 %v1568
        %v1648 = vpop.f32.mrb[0].mxu0
        %v1649 = vadd.f32 %v524, %v1648
        %v1650 = vpop.f32.mrb[0].mxu0
        %v1651 = vpop.f32.mrb[0].mxu0
        %v1652 = vadd.f32 %v524, %v1651
        %v1653 = vpop.f32.mrb[0].mxu0
        %1654 = vmatprep.mubr.bf16.mxu0 0
        %1655 = vmatmul.mubr.bf16.gmra.mrb[0].mxu0 %v1571
        %v1656 = vpop.f32.mrb[0].mxu0
        %v1657 = vadd.f32 %v524, %v1656
        %v1658 = vpop.f32.mrb[0].mxu0
        %v1659 = vpop.f32.mrb[0].mxu0
        %v1660 = vadd.f32 %v524, %v1659
        %v1661 = vpop.f32.mrb[0].mxu0
        %1662 = vmatprep.mubr.bf16.mxu0 0
        %1663 = vmatmul.mubr.bf16.gmra.mrb[0].mxu0 %v1574
        %v1664 = vpop.f32.mrb[0].mxu0
        %v1665 = vadd.f32 %v524, %v1664
        %v1666 = vpop.f32.mrb[0].mxu0
        %v1667 = vpop.f32.mrb[0].mxu0
        %v1668 = vadd.f32 %v524, %v1667
        %v1669 = vpop.f32.mrb[0].mxu0
        %1670 = vmatprep.mubr.bf16.mxu0 0
        %1671 = vmatmul.mubr.bf16.gmra.mrb[0].mxu0 %v1577
        %v1672 = vpop.f32.mrb[0].mxu0
        %v1673 = vadd.f32 %v524, %v1672
        %v1674 = vpop.f32.mrb[0].mxu0
        %v1675 = vpop.f32.mrb[0].mxu0
        %v1676 = vadd.f32 %v524, %v1675
        %v1677 = vpop.f32.mrb[0].mxu0
        %1678 = vdwg.mxu0
        %1679 = vmax.xlane.f32.xlu0 %v1617
        %v1680 = vpop.xlane.xlu0 %1679
        %1681 = vmax.xlane.f32.xlu0 %v1620
        %v1682 = vpop.xlane.xlu0 %1681
        %1683 = vmax.xlane.f32.xlu0 %v1625
        %v1684 = vpop.xlane.xlu0 %1683
        %1685 = vmax.xlane.f32.xlu0 %v1628
        %v1686 = vpop.xlane.xlu0 %1685
        %1687 = vmax.xlane.f32.xlu0 %v1633
        %v1688 = vpop.xlane.xlu0 %1687
        %1689 = vmax.xlane.f32.xlu0 %v1636
        %v1690 = vpop.xlane.xlu0 %1689
        %1691 = vmax.xlane.f32.xlu0 %v1641
        %v1692 = vpop.xlane.xlu0 %1691
        %1693 = vmax.xlane.f32.xlu0 %v1644
        %v1694 = vpop.xlane.xlu0 %1693
        %1695 = vmax.xlane.f32.xlu0 %v1649
        %v1696 = vpop.xlane.xlu0 %1695
        %1697 = vmax.xlane.f32.xlu0 %v1652
        %v1698 = vpop.xlane.xlu0 %1697
        %1699 = vmax.xlane.f32.xlu0 %v1657
        %v1700 = vpop.xlane.xlu0 %1699
        %1701 = vmax.xlane.f32.xlu0 %v1660
        %v1702 = vpop.xlane.xlu0 %1701
        %1703 = vmax.xlane.f32.xlu0 %v1665
        %v1704 = vpop.xlane.xlu0 %1703
        %1705 = vmax.xlane.f32.xlu0 %v1668
        %v1706 = vpop.xlane.xlu0 %1705
        %1707 = vmax.xlane.f32.xlu0 %v1673
        %v1708 = vpop.xlane.xlu0 %1707
        %1709 = vmax.xlane.f32.xlu0 %v1676
        %v1710 = vpop.xlane.xlu0 %1709
        %v1711 = vsub.f32 %v1617, %v1680
        %v1712 = vsub.f32 %v1620, %v1682
        %v1713 = vsub.f32 %v1625, %v1684
        %v1714 = vsub.f32 %v1628, %v1686
        %v1715 = vsub.f32 %v1633, %v1688
        %v1716 = vsub.f32 %v1636, %v1690
        %v1717 = vsub.f32 %v1641, %v1692
        %v1718 = vsub.f32 %v1644, %v1694
        %v1719 = vsub.f32 %v1649, %v1696
        %v1720 = vsub.f32 %v1652, %v1698
        %v1721 = vsub.f32 %v1657, %v1700
        %v1722 = vsub.f32 %v1660, %v1702
        %v1723 = vsub.f32 %v1665, %v1704
        %v1724 = vsub.f32 %v1668, %v1706
        %v1725 = vsub.f32 %v1673, %v1708
        %v1726 = vsub.f32 %v1676, %v1710
        %v1727 = vmul.f32 %v1711, 1.442695
        %v1728 = vpow.pop %v1727
        %v1729 = vmul.f32 %v1712, 1.442695
        %v1730 = vpow.pop %v1729
        %v1731 = vmul.f32 %v1713, 1.442695
        %v1732 = vpow.pop %v1731
        %v1733 = vmul.f32 %v1714, 1.442695
        %v1734 = vpow.pop %v1733
        %v1735 = vmul.f32 %v1715, 1.442695
        %v1736 = vpow.pop %v1735
        %v1737 = vmul.f32 %v1716, 1.442695
        %v1738 = vpow.pop %v1737
        %v1739 = vmul.f32 %v1717, 1.442695
        %v1740 = vpow.pop %v1739
        %v1741 = vmul.f32 %v1718, 1.442695
        %v1742 = vpow.pop %v1741
        %v1743 = vmul.f32 %v1719, 1.442695
        %v1744 = vpow.pop %v1743
        %v1745 = vmul.f32 %v1720, 1.442695
        %v1746 = vpow.pop %v1745
        %v1747 = vmul.f32 %v1721, 1.442695
        %v1748 = vpow.pop %v1747
        %v1749 = vmul.f32 %v1722, 1.442695
        %v1750 = vpow.pop %v1749
        %v1751 = vmul.f32 %v1723, 1.442695
        %v1752 = vpow.pop %v1751
        %v1753 = vmul.f32 %v1724, 1.442695
        %v1754 = vpow.pop %v1753
        %v1755 = vmul.f32 %v1725, 1.442695
        %v1756 = vpow.pop %v1755
        %v1757 = vmul.f32 %v1726, 1.442695
        %v1758 = vpow.pop %v1757
        %1759 = vadd.xlane.f32.xlu0 %v1728
        %v1760 = vpop.xlane.xlu0 %1759
        %1761 = vadd.xlane.f32.xlu0 %v1730
        %v1762 = vpop.xlane.xlu0 %1761
        %1763 = vadd.xlane.f32.xlu0 %v1732
        %v1764 = vpop.xlane.xlu0 %1763
        %1765 = vadd.xlane.f32.xlu0 %v1734
        %v1766 = vpop.xlane.xlu0 %1765
        %1767 = vadd.xlane.f32.xlu0 %v1736
        %v1768 = vpop.xlane.xlu0 %1767
        %1769 = vadd.xlane.f32.xlu0 %v1738
        %v1770 = vpop.xlane.xlu0 %1769
        %1771 = vadd.xlane.f32.xlu0 %v1740
        %v1772 = vpop.xlane.xlu0 %1771
        %1773 = vadd.xlane.f32.xlu0 %v1742
        %v1774 = vpop.xlane.xlu0 %1773
        %1775 = vadd.xlane.f32.xlu0 %v1744
        %v1776 = vpop.xlane.xlu0 %1775
        %1777 = vadd.xlane.f32.xlu0 %v1746
        %v1778 = vpop.xlane.xlu0 %1777
        %1779 = vadd.xlane.f32.xlu0 %v1748
        %v1780 = vpop.xlane.xlu0 %1779
        %1781 = vadd.xlane.f32.xlu0 %v1750
        %v1782 = vpop.xlane.xlu0 %1781
        %1783 = vadd.xlane.f32.xlu0 %v1752
        %v1784 = vpop.xlane.xlu0 %1783
        %1785 = vadd.xlane.f32.xlu0 %v1754
        %v1786 = vpop.xlane.xlu0 %1785
        %1787 = vadd.xlane.f32.xlu0 %v1756
        %v1788 = vpop.xlane.xlu0 %1787
        %1789 = vadd.xlane.f32.xlu0 %v1758
        %v1790 = vpop.xlane.xlu0 %1789
        %v1791 = vrcp.pop %v1760
        %v1792 = vrcp.pop %v1762
        %v1793 = vrcp.pop %v1764
        %v1794 = vrcp.pop %v1766
        %v1795 = vrcp.pop %v1768
        %v1796 = vrcp.pop %v1770
        %v1797 = vrcp.pop %v1772
        %v1798 = vrcp.pop %v1774
        %v1799 = vrcp.pop %v1776
        %v1800 = vrcp.pop %v1778
        %v1801 = vrcp.pop %v1780
        %v1802 = vrcp.pop %v1782
        %v1803 = vrcp.pop %v1784
        %v1804 = vrcp.pop %v1786
        %v1805 = vrcp.pop %v1788
        %v1806 = vrcp.pop %v1790
        %v1807 = vmul.f32 %v1728, %v1791
        %v1808 = vmul.f32 %v1730, %v1792
        %v1809 = vmul.f32 %v1732, %v1793
        %v1810 = vmul.f32 %v1734, %v1794
        %v1811 = vmul.f32 %v1736, %v1795
        %v1812 = vmul.f32 %v1738, %v1796
        %v1813 = vmul.f32 %v1740, %v1797
        %v1814 = vmul.f32 %v1742, %v1798
        %v1815 = vmul.f32 %v1744, %v1799
        %v1816 = vmul.f32 %v1746, %v1800
        %v1817 = vmul.f32 %v1748, %v1801
        %v1818 = vmul.f32 %v1750, %v1802
        %v1819 = vmul.f32 %v1752, %v1803
        %v1820 = vmul.f32 %v1754, %v1804
        %v1821 = vmul.f32 %v1756, %v1805
        %v1822 = vmul.f32 %v1758, %v1806
        %v1823 = vpack.c.bf16 %v1808, %v1807
        %v1824 = vpack.c.bf16 %v1810, %v1809
        %v1825 = vpack.c.bf16 %v1812, %v1811
        %v1826 = vpack.c.bf16 %v1814, %v1813
        %v1827 = vpack.c.bf16 %v1816, %v1815
        %v1828 = vpack.c.bf16 %v1818, %v1817
        %v1829 = vpack.c.bf16 %v1820, %v1819
        %v1830 = vpack.c.bf16 %v1822, %v1821
        %1831 = vmatprep.subr.bf16.mxu0 0
        %1832 = vmatpush1.bf16.xpose.msra.mxu0 %v1823
        %1833 = vmatprep.subr.bf16.mxu0 0
        %1834 = vmatpush1.bf16.xpose.msra.mxu0 %v1824
        %1835 = vmatprep.subr.bf16.mxu0 0
        %1836 = vmatpush1.bf16.xpose.msra.mxu0 %v1825
        %1837 = vmatprep.subr.bf16.mxu0 0
        %1838 = vmatpush1.bf16.xpose.msra.mxu0 %v1826
        %1839 = vmatprep.subr.bf16.mxu0 0
        %1840 = vmatpush1.bf16.xpose.msra.mxu0 %v1827
        %1841 = vmatprep.subr.bf16.mxu0 0
        %1842 = vmatpush1.bf16.xpose.msra.mxu0 %v1828
        %1843 = vmatprep.subr.bf16.mxu0 0
        %1844 = vmatpush1.bf16.xpose.msra.mxu0 %v1829
        %1845 = vmatprep.subr.bf16.mxu0 0
        %1846 = vmatpush1.bf16.xpose.msra.mxu0 %v1830
        %1847 = vmatprep.subr.bf16.mxu0 0
        %1848 = vmatpush1.bf16.xpose.msra.mxu0 0
        %1849 = vmatprep.subr.bf16.mxu0 0
        %1850 = vmatpush1.bf16.xpose.msra.mxu0 0
        %1851 = vmatprep.subr.bf16.mxu0 0
        %1852 = vmatpush1.bf16.xpose.msra.mxu0 0
        %1853 = vmatprep.subr.bf16.mxu0 0
        %1854 = vmatpush1.bf16.xpose.msra.mxu0 0
        %1855 = vmatprep.subr.bf16.mxu0 0
        %1856 = vmatpush1.bf16.xpose.msra.mxu0 0
        %1857 = vmatprep.subr.bf16.mxu0 0
        %1858 = vmatpush1.bf16.xpose.msra.mxu0 0
        %1859 = vmatprep.subr.bf16.mxu0 0
        %1860 = vmatpush1.bf16.xpose.msra.mxu0 0
        %1861 = vmatprep.subr.bf16.mxu0 0
        %1862 = vmatpush1.bf16.xpose.msra.mxu0 0
        %1863 = vmatprep.mubr.bf16.mxu0 0
        %1864 = vmatmul.mubr.bf16.gmra.mrb[0].mxu0 %v1535
        %v1865 = vpop.f32.mrb[0].mxu0
        %v1866 = vadd.f32 0.0, %v1865
        %v1867 = vpop.f32.mrb[0].mxu0
        %v1868 = vpop.f32.mrb[0].mxu0
        %v1869 = vpop.f32.mrb[0].mxu0
        %1870 = vdwg.mxu0
        %1871 = vst [vmem:[#allocation2 + $0x18] sm:$0xff] %v1866
        %v1872 = vld [vmem:[#allocation2] sm:$0xff]
        %v1873 = vld [vmem:[#allocation2 + $0x8] sm:$0xff]
        %v1874 = vld [vmem:[#allocation2 + $0x10] sm:$0xff]
        %v1875 = vld [vmem:[#allocation2 + $0x18] sm:$0xff]
        %v1876 = vpack.c.bf16 %v1873, %v1872
        %v1877 = vpack.c.bf16 %v1875, %v1874
        %v1878 = vld [vmem:[#allocation6] sm:$0xf]
        %v1879 = vld [vmem:[#allocation6 + $0x4] sm:$0xf]
        %v1880 = vld [vmem:[#allocation6 + $0x8] sm:$0xf]
        %v1881 = vld [vmem:[#allocation6 + $0xc] sm:$0xf]
        %v1882 = vld [vmem:[%s7] sm:$0xff]
        %v1883 = vld [vmem:[%s7 + $0x8] sm:$0xff]
        %v1884 = vld [vmem:[%s7 + $0x10] sm:$0xff]
        %v1885 = vld [vmem:[%s7 + $0x18] sm:$0xff]
        %1887 = vset.pattern.permute.xlu0 0
        %1888 = vperm.xlu0 %1887, %v1882
        %v1889 = vpop.permute.xlu0 %1888
        %1892 = vset.pattern.permute.xlu0 0
        %1893 = vperm.xlu0 %1892, %v1883
        %v1894 = vpop.permute.xlu0 %1893
        %1897 = vset.pattern.permute.xlu0 0
        %1898 = vperm.xlu0 %1897, %v1884
        %v1899 = vpop.permute.xlu0 %1898
        %1902 = vset.pattern.permute.xlu0 0
        %1903 = vperm.xlu0 %1902, %v1885
        %v1904 = vpop.permute.xlu0 %1903
        %v1910 = vunpack.c.l.b16 %v1878
        %v1911 = vunpack.c.l.b16 %v1879
        %v1912 = vunpack.c.l.b16 %v1880
        %v1913 = vunpack.c.l.b16 %v1881
        %v1914 = vpack.c.b16 %v1911, %v1910
        %v1915 = vpack.c.b16 %v1913, %v1912
        %v1917 = vsel %vm459, %v1914, 0
        %v1920 = vsel %vm459, %v1915, 0
        %1922 = vmatprep.subr.bf16.mxu0 0
        %1923 = vmatpush1.bf16.msra.mxu0 %v1876
        %1924 = vmatprep.subr.bf16.mxu0 0
        %1925 = vmatpush1.bf16.msra.mxu0 %v1877
        %1926 = vmatprep.subr.bf16.mxu0 0
        %1927 = vmatpush1.bf16.msra.mxu0 0
        %1928 = vmatprep.subr.bf16.mxu0 0
        %1929 = vmatpush1.bf16.msra.mxu0 0
        %1930 = vmatprep.subr.bf16.mxu0 0
        %1931 = vmatpush1.bf16.msra.mxu0 0
        %1932 = vmatprep.subr.bf16.mxu0 0
        %1933 = vmatpush1.bf16.msra.mxu0 0
        %1934 = vmatprep.subr.bf16.mxu0 0
        %1935 = vmatpush1.bf16.msra.mxu0 0
        %1936 = vmatprep.subr.bf16.mxu0 0
        %1937 = vmatpush1.bf16.msra.mxu0 0
        %1938 = vmatprep.subr.bf16.mxu0 0
        %1939 = vmatpush1.bf16.msra.mxu0 0
        %1940 = vmatprep.subr.bf16.mxu0 0
        %1941 = vmatpush1.bf16.msra.mxu0 0
        %1942 = vmatprep.subr.bf16.mxu0 0
        %1943 = vmatpush1.bf16.msra.mxu0 0
        %1944 = vmatprep.subr.bf16.mxu0 0
        %1945 = vmatpush1.bf16.msra.mxu0 0
        %1946 = vmatprep.subr.bf16.mxu0 0
        %1947 = vmatpush1.bf16.msra.mxu0 0
        %1948 = vmatprep.subr.bf16.mxu0 0
        %1949 = vmatpush1.bf16.msra.mxu0 0
        %1950 = vmatprep.subr.bf16.mxu0 0
        %1951 = vmatpush1.bf16.msra.mxu0 0
        %1952 = vmatprep.subr.bf16.mxu0 0
        %1953 = vmatpush1.bf16.msra.mxu0 0
        %1954 = vmatprep.mubr.bf16.mxu0 0
        %1955 = vmatmul.mubr.bf16.gmra.mrb[0].mxu0 %v1917
        %v1956 = vpop.f32.mrb[0].mxu0
        %v1957 = vadd.f32 %v1889, %v1956
        %v1958 = vpop.f32.mrb[0].mxu0
        %v1959 = vpop.f32.mrb[0].mxu0
        %v1960 = vadd.f32 %v1894, %v1959
        %v1961 = vpop.f32.mrb[0].mxu0
        %1962 = vmatprep.mubr.bf16.mxu0 0
        %1963 = vmatmul.mubr.bf16.gmra.mrb[0].mxu0 %v1920
        %v1964 = vpop.f32.mrb[0].mxu0
        %v1965 = vadd.f32 %v1899, %v1964
        %v1966 = vpop.f32.mrb[0].mxu0
        %v1967 = vpop.f32.mrb[0].mxu0
        %v1968 = vadd.f32 %v1904, %v1967
        %v1969 = vpop.f32.mrb[0].mxu0
        %1970 = vdwg.mxu0
        %1971 = vst [vmem:[%s390] sm:$0xff] %v1957
        %1972 = vst [vmem:[%s390 + $0x8] sm:$0xff] %v1960
        %1973 = vst [vmem:[%s390 + $0x10] sm:$0xff] %v1965
        %1974 = vst [vmem:[%s390 + $0x18] sm:$0xff] %v1968
        %s1975 = sand.u32 %s233, 1
        %s1976 = scalar_lea.sflag [#allocation5], %s1975
        %s1977 = sand.u32 %s233, 1
        %s1978 = smul.addr %s1977, 32
        %s1979 = scalar_lea.vmem [#allocation8], %s1978
        // Predicated region
        $region61: #{tpu_custom_call.1} parent=51 // pred_check
          %p1980 = pneg %p243
        $region62: #{tpu_custom_call.1} parent=51 // pred_check_branch
          %1982 = sbr.rel (%p1980) target = $region64
        $region63: #{tpu_custom_call.1} parent=51 // pred_region
          %s1984 = ssub.s32 512, 512
          %1985 = vsyncadd %s1976, %s1984
          %s1986 = smul.addr %s30, 4
          %s1987 = sadd.s32 %s31, %s1986
          %s1988 = smul.addr %s1987, 128
          %s1989 = scalar_lea.hbm %s8, %s1988
          %s1990 = sshll.u32 %s1979, 4
          %s1991 = int_to_ptr.vmem [resolvable:$true] %s1990
          %1996 = dma.vmem_to_hbm [thread:$0]  %s1991, 512, %s1989, %s1976, 128, 128, 8
        $region64: #{tpu_custom_call.1} parent=51 // pred_fallthru
          _
      $region52: #{tpu_custom_call.1} parent=5 // pred_fallthru
        _
      %p1997 = scmp.le.s32.totalorder 2, %s21
      // Predicated region
      $region65: #{tpu_custom_call.1} parent=5 // pred_check
        %p1998 = pneg %p1997
      $region66: #{tpu_custom_call.1} parent=5 // pred_check_branch
        %2000 = sbr.rel (%p1998) target = $region68
      $region67: #{tpu_custom_call.1} parent=5 // pred_region
        %s2001 = ssub.s32 %s21, 2
        // Predicated region
        $region69: #{tpu_custom_call.1} parent=67 // pred_check
          %p2002 = pneg %p249
        $region70: #{tpu_custom_call.1} parent=67 // pred_check_branch
          %2004 = sbr.rel (%p2002) target = $region72
        $region71: #{tpu_custom_call.1} parent=67 // pred_region
          %s2005 = sand.u32 %s234, 1
          %s2006 = scalar_lea.sflag [#allocation5], %s2005
          %s2007 = sand.u32 %s234, 1
          %s2008 = smul.addr %s2007, 32
          %s2009 = scalar_lea.vmem [#allocation8], %s2008
          %2010 = dma.done %s2006, 512
        $region72: #{tpu_custom_call.1} parent=67 // pred_fallthru
          _
      $region68: #{tpu_custom_call.1} parent=5 // pred_fallthru
        _
    $region6: #{tpu_custom_call.1} parent=1 // loop_footer
      %s25 = sadd.s32 1, %s21
    $region7: #{tpu_custom_call.1} parent=1 // loop_footer_branch
      %20 = sbr.rel target = $region3
    $region8: #{tpu_custom_call.1} parent=1 // loop_exit
      _
    %2011 = vsyncpa [#allocation4], 1
    %s2012 = scalar_lea.sflag [#allocation4], 1
    %2013 = vsyncpa %s2012, 1
    %2014 = vsyncpa [#allocation7], 1
    %2015 = vsyncpa [#allocation5], 1
    %s2016 = scalar_lea.sflag [#allocation5], 1
    %2017 = vsyncpa %s2016, 1

</llo_original>
